<compile_context>
chip_gen: v6e
topology: v6e:2x2x1
jax: 0.10.0
libtpu: 0.0.40
codegen_flags: <defaults>
</compile_context>

<pallas_src>
import math
import functools

import jax
import jax.numpy as jnp
from jax import lax
from jax.experimental import pallas as pl
from jax.experimental.pallas import tpu as pltpu


_VMEM_LIMIT = 64 * 1024 * 1024  # safe on v5e/v6e (128 MiB) and v7x (64 MiB phys)


# ----------------------------------------------------------------------------
# helpers
# ----------------------------------------------------------------------------
def _round_up(x, m):
    return (x + m - 1) // m * m


def _row_tile(rows, max_tile=256):
    """Row tile: max_tile once there is enough work, else one aligned tile."""
    return max_tile if rows >= max_tile else _round_up(rows, 8)


def _const_spec(shape):
    """Whole-array block, same block index for every grid step (weights)."""
    return pl.BlockSpec(shape, lambda i, n=len(shape): (0,) * n)


def _layernorm(x, gamma, beta, eps=1e-5):
    mean = jnp.mean(x, axis=-1, keepdims=True)
    var = jnp.mean((x - mean) ** 2, axis=-1, keepdims=True)
    return (x - mean) * lax.rsqrt(var + eps) * gamma + beta


# ----------------------------------------------------------------------------
# kernels
# ----------------------------------------------------------------------------
def linear_kernel(x_ref, w_ref, b_ref, o_ref):
    """(tm, K) @ (K, tn) + (1, tn): bf16 operands, f32 accumulation."""
    acc = jnp.dot(x_ref[...].astype(jnp.bfloat16), w_ref[...],
                  preferred_element_type=jnp.float32)
    o_ref[...] = (acc + b_ref[...]).astype(o_ref.dtype)


def flash_attn_kernel(q_ref, k_ref, v_ref, o_ref, m_ref, l_ref, acc_ref):
    """Online-softmax attention for one (batch, head), kv axis on the grid.

    q_ref: (S, dh) bf16 (1/sqrt(dh) already folded into the Q projection)
    k_ref, v_ref: (tkv, dh) bf16
    o_ref: (S, dh) bf16, resident across the kv grid axis
    """
    kv = pl.program_id(2)

    @pl.when(kv == 0)
    def _():
        m_ref[...] = jnp.full_like(m_ref, -jnp.inf)
        l_ref[...] = jnp.zeros_like(l_ref)
        acc_ref[...] = jnp.zeros_like(acc_ref)

    q = q_ref[...]
    k = k_ref[...]
    v = v_ref[...]
    # scores: contract dh (q @ k^T) with f32 accumulation
    s = lax.dot_general(q, k, (((1,), (1,)), ((), ())),
                        preferred_element_type=jnp.float32)      # (S, tkv)

    m_prev = m_ref[...]
    m_new = jnp.maximum(m_prev, jnp.max(s, axis=-1, keepdims=True))
    alpha = jnp.exp(m_prev - m_new)
    p = jnp.exp(s - m_new)
    l_ref[...] = alpha * l_ref[...] + jnp.sum(p, axis=-1, keepdims=True)
    acc_ref[...] = alpha * acc_ref[...] + jnp.dot(
        p.astype(jnp.bfloat16), v, preferred_element_type=jnp.float32)
    m_ref[...] = m_new

    @pl.when(kv == pl.num_programs(2) - 1)
    def _():
        # exact normalization (no approx reciprocal) for tight parity with f32
        o_ref[...] = (acc_ref[...] / l_ref[...]).astype(o_ref.dtype)


def outproj_ffn_kernel(attn_ref, x_ref, wo_ref, bo_ref, ln1g_ref, ln1b_ref,
                       w1_ref, b1_ref, w2_ref, b2_ref, ln2g_ref, ln2b_ref,
                       o_ref):
    """Attention out-proj + residual + LN1 + FFN + residual + LN2 (row tile)."""
    x = x_ref[...]                                     # (tm, E) f32 residual
    proj = jnp.dot(attn_ref[...], wo_ref[...],
                   preferred_element_type=jnp.float32) + bo_ref[...]
    # dropout layers are identity here (eval-mode forward semantics)
    x1 = _layernorm(x + proj, ln1g_ref[...], ln1b_ref[...])
    h = jnp.dot(x1.astype(jnp.bfloat16), w1_ref[...],
                preferred_element_type=jnp.float32) + b1_ref[...]
    h = jnp.maximum(h, 0.0)
    ff = jnp.dot(h.astype(jnp.bfloat16), w2_ref[...],
                 preferred_element_type=jnp.float32) + b2_ref[...]
    o_ref[...] = _layernorm(x1 + ff, ln2g_ref[...], ln2b_ref[...]).astype(o_ref.dtype)


# ----------------------------------------------------------------------------
# pallas_call wrappers
# ----------------------------------------------------------------------------
def linear(x, w_bf16, b, *, out_dtype=jnp.float32, row_tile_max=256):
    """Row-tiled (and, when N % 128 == 0, column-tiled) y = x @ w + b."""
    R, K = x.shape
    N = w_bf16.shape[1]
    tm = _row_tile(R, row_tile_max)
    R_pad = _round_up(R, tm)
    if R_pad != R:
        x = jnp.pad(x, ((0, R_pad - R), (0, 0)))
    if N % 128 == 0:
        tn = 256 if N % 256 == 0 else 128
    else:
        tn = N  # lane-narrow fallback; only hit for tiny demo-sized N
    y = pl.pallas_call(
        linear_kernel,
        out_shape=jax.ShapeDtypeStruct((R_pad, N), out_dtype),
        grid=(R_pad // tm, N // tn),
        in_specs=[pl.BlockSpec((tm, K), lambda i, j: (i, 0)),
                  pl.BlockSpec((K, tn), lambda i, j: (0, j)),
                  pl.BlockSpec((1, tn), lambda i, j: (0, j))],
        out_specs=pl.BlockSpec((tm, tn), lambda i, j: (i, j)),
        compiler_params=pltpu.CompilerParams(
            dimension_semantics=("parallel", "parallel"),
            vmem_limit_bytes=_VMEM_LIMIT),
    )(x, w_bf16, b)
    return y[:R] if R_pad != R else y


def attention(q, k, v):
    """q, k, v: (B, H, S, dh) bf16 -> (B, H, S, dh) bf16.

    Grid is (batch, head, kv_tile): each step handles one head's kv tile with
    an online softmax, so the live score tensor is (S, tkv) f32 per step.
    """
    B, H, S, dh = q.shape
    tkv = S
    for cand in (512, 256, 128):
        if S > cand and S % cand == 0:
            tkv = cand
            break
    # TODO(synk): also tile the q axis (full flash) for very long sequences so
    # the (S, dh) accumulator / (S, tkv) scores stay bounded.
    qo_spec = pl.BlockSpec((None, None, S, dh), lambda b, h, kv: (b, h, 0, 0))
    kv_spec = pl.BlockSpec((None, None, tkv, dh), lambda b, h, kv: (b, h, kv, 0))
    return pl.pallas_call(
        flash_attn_kernel,
        out_shape=jax.ShapeDtypeStruct((B, H, S, dh), jnp.bfloat16),
        grid=(B, H, S // tkv),
        in_specs=[qo_spec, kv_spec, kv_spec],
        out_specs=qo_spec,
        scratch_shapes=[pltpu.VMEM((S, 1), jnp.float32),
                        pltpu.VMEM((S, 1), jnp.float32),
                        pltpu.VMEM((S, dh), jnp.float32)],
        compiler_params=pltpu.CompilerParams(
            dimension_semantics=("parallel", "parallel", "arbitrary"),
            vmem_limit_bytes=_VMEM_LIMIT),
    )(q, k, v)


def outproj_ffn(attn_flat, x_flat, p):
    """Fused out-proj + LN1 + FFN + LN2 over row-flattened activations."""
    R, E = x_flat.shape
    tm = _row_tile(R)
    R_pad = _round_up(R, tm)
    if R_pad != R:
        pad = ((0, R_pad - R), (0, 0))
        attn_flat = jnp.pad(attn_flat, pad)
        x_flat = jnp.pad(x_flat, pad)
    weights = [p["wo"], p["bo"], p["ln1_g"], p["ln1_b"],
               p["w1"], p["b1"], p["w2"], p["b2"], p["ln2_g"], p["ln2_b"]]
    row_spec = pl.BlockSpec((tm, E), lambda i: (i, 0))
    # TODO(synk): for large E*H (e.g. E=1024, H=4096), tile w1/w2 over the
    # hidden dim inside the kernel and single-buffer the constant-index weight
    # blocks so the fused kernel fits v7x's 64 MiB VMEM.
    out = pl.pallas_call(
        outproj_ffn_kernel,
        out_shape=jax.ShapeDtypeStruct((R_pad, E), jnp.float32),
        grid=(R_pad // tm,),
        in_specs=[row_spec, row_spec] + [_const_spec(w.shape) for w in weights],
        out_specs=row_spec,
        compiler_params=pltpu.CompilerParams(
            dimension_semantics=("parallel",),
            vmem_limit_bytes=_VMEM_LIMIT),
    )(attn_flat, x_flat, *weights)
    return out[:R] if R_pad != R else out


# ----------------------------------------------------------------------------
# forward pass
# ----------------------------------------------------------------------------
def huobz_transformer_forward(token_ids, params, *, num_heads, vocab_size):
    B, S = token_ids.shape
    E = params["embedding"].shape[1]
    dh = E // num_heads

    # Embedding lookup: plain-JAX gather glue (table stays in HBM).
    x = jnp.take(params["embedding"], token_ids, axis=0)            # (B, S, E) f32
    x_flat = x.reshape(B * S, E)

    for p in params["layers"]:
        # QKV projection on row-flattened activations, emitted in bf16.
        qkv = linear(x_flat, p["wqkv"], p["bqkv"], out_dtype=jnp.bfloat16)  # (R, 3E)
        # Single reshape + single transpose for the head split (XLA glue).
        qkv = qkv.reshape(B, S, 3, num_heads, dh).transpose(2, 0, 3, 1, 4)  # (3,B,H,S,dh)
        attn = attention(qkv[0], qkv[1], qkv[2])                    # (B, H, S, dh) bf16
        attn_flat = attn.transpose(0, 2, 1, 3).reshape(B * S, E)    # head merge (bf16)
        x_flat = outproj_ffn(attn_flat, x_flat, p)                  # (R, E) f32 residual

    logits = linear(x_flat.astype(jnp.bfloat16), params["fc_w"], params["fc_b"],
                    row_tile_max=512)                               # (R, V_pad) f32
    logits = logits[:, :vocab_size]
    return logits.reshape(B, S, vocab_size)


# ----------------------------------------------------------------------------
# Parameter construction (f32 masters) + one-time inference preparation
# ----------------------------------------------------------------------------
def init_params(key, vocab_size, embed_size, num_layers, hidden_dim):
    keys = jax.random.split(key, 2 + num_layers)
    params = {
        "embedding": jax.random.normal(keys[0], (vocab_size, embed_size), jnp.float32) * 0.1,
        "fc_w": jax.random.normal(keys[1], (embed_size, vocab_size), jnp.float32) * 0.1,
        "fc_b": jnp.zeros((1, vocab_size), jnp.float32),
        "layers": [],
    }
    for l in range(num_layers):
        ks = jax.random.split(keys[2 + l], 4)
        E, H = embed_size, hidden_dim
        params["layers"].append({
            "wqkv": jax.random.normal(ks[0], (E, 3 * E), jnp.float32) * 0.1,
            "bqkv": jnp.zeros((1, 3 * E), jnp.float32),
            "wo":   jax.random.normal(ks[1], (E, E), jnp.float32) * 0.1,
            "bo":   jnp.zeros((1, E), jnp.float32),
            "w1":   jax.random.normal(ks[2], (E, H), jnp.float32) * 0.1,
            "b1":   jnp.zeros((1, H), jnp.float32),
            "w2":   jax.random.normal(ks[3], (H, E), jnp.float32) * 0.1,
            "b2":   jnp.zeros((1, E), jnp.float32),
            "ln1_g": jnp.ones((1, E), jnp.float32),
            "ln1_b": jnp.zeros((1, E), jnp.float32),
            "ln2_g": jnp.ones((1, E), jnp.float32),
            "ln2_b": jnp.zeros((1, E), jnp.float32),
        })
    return params


def prepare_inference_params(params, num_heads):
    """One-time weight prep OUTSIDE jit: bf16 cast, lane padding, scale fold."""
    E = params["embedding"].shape[1]
    dh = E // num_heads
    scale = 1.0 / math.sqrt(dh)
    V = params["fc_w"].shape[1]
    V_pad = _round_up(V, 128)

    prepared = {
        "embedding": params["embedding"],                            # f32 gather table
        "fc_w": jnp.pad(params["fc_w"], ((0, 0), (0, V_pad - V))).astype(jnp.bfloat16),
        "fc_b": jnp.pad(params["fc_b"], ((0, 0), (0, V_pad - V))),
        "layers": [],
    }
    for p in params["layers"]:
        H = p["w1"].shape[1]
        H_pad = _round_up(H, 128)
        # Fold the 1/sqrt(dh) attention scale into the Q projection.
        wqkv = p["wqkv"].at[:, :E].multiply(scale)
        bqkv = p["bqkv"].at[:, :E].multiply(scale)
        prepared["layers"].append({
            "wqkv": wqkv.astype(jnp.bfloat16),
            "bqkv": bqkv,
            "wo":   p["wo"].astype(jnp.bfloat16),
            "bo":   p["bo"],
            # Pad the FFN hidden dim to a multiple of 128 (zero rows/cols are
            # exact no-ops through ReLU) so the hidden activation is lane-dense.
            "w1":   jnp.pad(p["w1"], ((0, 0), (0, H_pad - H))).astype(jnp.bfloat16),
            "b1":   jnp.pad(p["b1"], ((0, 0), (0, H_pad - H))),
            "w2":   jnp.pad(p["w2"], ((0, H_pad - H), (0, 0))).astype(jnp.bfloat16),
            "b2":   p["b2"],
            "ln1_g": p["ln1_g"], "ln1_b": p["ln1_b"],
            "ln2_g": p["ln2_g"], "ln2_b": p["ln2_b"],
        })
    return prepared


# ----------------------------------------------------------------------------
# Pure-JAX f32 reference (PyTorch eval-mode semantics) for a sanity check
# ----------------------------------------------------------------------------
def reference_forward(token_ids, params, num_heads):
    def ln(x, g, b, eps=1e-5):
        m = jnp.mean(x, -1, keepdims=True)
        v = jnp.mean((x - m) ** 2, -1, keepdims=True)
        return (x - m) * lax.rsqrt(v + eps) * g + b

    x = jnp.take(params["embedding"], token_ids, axis=0)
    B, S, E = x.shape
    dh = E // num_heads
    for p in params["layers"]:
        qkv = x @ p["wqkv"] + p["bqkv"]
        q, k, v = qkv[..., :E], qkv[..., E:2 * E], qkv[..., 2 * E:]
        q = q.reshape(B, S, num_heads, dh).transpose(0, 2, 1, 3)
        k = k.reshape(B, S, num_heads, dh).transpose(0, 2, 1, 3)
        v = v.reshape(B, S, num_heads, dh).transpose(0, 2, 1, 3)
        s = jnp.einsum("bhqd,bhkd->bhqk", q, k) / math.sqrt(dh)
        a = jax.nn.softmax(s, axis=-1)
        o = jnp.einsum("bhqk,bhkd->bhqd", a, v).transpose(0, 2, 1, 3).reshape(B, S, E)
        o = o @ p["wo"] + p["bo"]
        x = ln(x + o, p["ln1_g"], p["ln1_b"])
        ff = jnp.maximum(x @ p["w1"] + p["b1"], 0.0) @ p["w2"] + p["b2"]
        x = ln(x + ff, p["ln2_g"], p["ln2_b"])
    return x @ params["fc_w"] + params["fc_b"]


# ----------------------------------------------------------------------------
if __name__ == "__main__":
    vocab_size, embed_size, num_heads, num_layers, hidden_dim = 64, 32, 4, 2, 64
    B, S = 2, 8

    key = jax.random.PRNGKey(0)
    k_param, k_ids = jax.random.split(key)
    params = init_params(k_param, vocab_size, embed_size, num_layers, hidden_dim)
    token_ids = jax.random.randint(k_ids, (B, S), 0, vocab_size, dtype=jnp.int32)

    # One-time weight cast/pad/scale-fold, outside the jitted forward.
    inf_params = prepare_inference_params(params, num_heads)

    fwd = jax.jit(functools.partial(huobz_transformer_forward,
                                    num_heads=num_heads, vocab_size=vocab_size))
    out = jax.block_until_ready(fwd(token_ids, inf_params))

    ref = reference_forward(token_ids, params, num_heads)
    assert out.shape == (B, S, vocab_size)
    max_err = float(jnp.max(jnp.abs(out - ref)))
    # bf16 matmul inputs (f32 accumulation) => loosened tolerance vs pure-f32.
    assert jnp.allclose(out, ref, rtol=5e-2, atol=5e-2), \
        f"mismatch vs reference (max abs err {max_err})"

    # TODO(synk): dropout inside TransformerEncoderLayer is treated as identity
    # (eval-mode forward); stochastic training-mode dropout is not implemented.
    # TODO(synk): no attn_mask / src_key_padding_mask support (unmasked full
    # attention only), matching the reference module's forward as written.
    print("KERNEL_OK")
</pallas_src>

<mosaic_0001>
module attributes {stable_mosaic.version = 11 : i64} {
  func.func @linear_kernel(%arg0: i32, %arg1: i32, %arg2: memref<16x32xf32, #tpu.memory_space<vmem>>, %arg3: memref<32x96xbf16, #tpu.memory_space<vmem>>, %arg4: memref<1x96xf32, #tpu.memory_space<vmem>>, %arg5: memref<16x96xbf16, #tpu.memory_space<vmem>>) attributes {dimension_semantics = [#tpu.dimension_semantics<parallel>, #tpu.dimension_semantics<parallel>], iteration_bounds = array<i64: 1, 1>, scalar_prefetch = 0 : i64, scratch_operands = 0 : i64, tpu.core_type = #tpu.core_type<tc>, window_params = [{transform_indices = @transform_0, window_bounds = array<i64: 16, 32>}, {transform_indices = @transform_1, window_bounds = array<i64: 32, 96>}, {transform_indices = @transform_2, window_bounds = array<i64: 1, 96>}, {transform_indices = @transform_3, window_bounds = array<i64: 16, 96>}]} {
    %c0 = arith.constant 0 : index
    %c0_0 = arith.constant 0 : index
    %0 = vector.load %arg2[%c0, %c0_0] : memref<16x32xf32, #tpu.memory_space<vmem>>, vector<16x32xf32>
    %1 = arith.truncf %0 : vector<16x32xf32> to vector<16x32xbf16>
    %c0_1 = arith.constant 0 : index
    %c0_2 = arith.constant 0 : index
    %2 = vector.load %arg3[%c0_1, %c0_2] : memref<32x96xbf16, #tpu.memory_space<vmem>>, vector<32x96xbf16>
    %cst = arith.constant dense<0.000000e+00> : vector<16x96xf32>
    %3 = tpu.matmul %1, %2, %cst {dimension_numbers = #tpu.dot_dimension_numbers<[1], [0], [0], [1], [0, 0, 1, 1], [], []>} : vector<16x32xbf16>, vector<32x96xbf16>, vector<16x96xf32> -> vector<16x96xf32>
    %c0_3 = arith.constant 0 : index
    %c0_4 = arith.constant 0 : index
    %4 = vector.load %arg4[%c0_3, %c0_4] : memref<1x96xf32, #tpu.memory_space<vmem>>, vector<1x96xf32>
    %5 = vector.broadcast %4 : vector<1x96xf32> to vector<16x96xf32>
    %6 = arith.addf %3, %5 : vector<16x96xf32>
    %7 = arith.truncf %6 : vector<16x96xf32> to vector<16x96xbf16>
    %c0_5 = arith.constant 0 : index
    %c0_6 = arith.constant 0 : index
    %8 = vector.load %arg5[%c0_5, %c0_6] : memref<16x96xbf16, #tpu.memory_space<vmem>>, vector<16x96xbf16>
    tpu.vector_store %arg5[%c0_5, %c0_6], %7 {strides = array<i32>} : memref<16x96xbf16, #tpu.memory_space<vmem>>, vector<16x96xbf16>,
    return
  }
  func.func @transform_0(%arg0: i32, %arg1: i32) -> (i32, i32) {
    %c0_i32 = arith.constant 0 : i32
    %c0_i32_0 = arith.constant 0 : i32
    return %arg0, %c0_i32 : i32, i32
  }
  func.func @transform_1(%arg0: i32, %arg1: i32) -> (i32, i32) {
    %c0_i32 = arith.constant 0 : i32
    %c0_i32_0 = arith.constant 0 : i32
    return %c0_i32, %arg1 : i32, i32
  }
  func.func @transform_2(%arg0: i32, %arg1: i32) -> (i32, i32) {
    %c0_i32 = arith.constant 0 : i32
    %c0_i32_0 = arith.constant 0 : i32
    return %c0_i32, %arg1 : i32, i32
  }
  func.func @transform_3(%arg0: i32, %arg1: i32) -> (i32, i32) {
    %c0_i32 = arith.constant 0 : i32
    return %arg0, %arg1 : i32, i32
  }
}

module attributes {stable_mosaic.version = 11 : i64} {
  func.func @flash_attn_kernel(%arg0: i32, %arg1: i32, %arg2: i32, %arg3: memref<1x1x8x8xbf16, #tpu.memory_space<vmem>>, %arg4: memref<1x1x8x8xbf16, #tpu.memory_space<vmem>>, %arg5: memref<1x1x8x8xbf16, #tpu.memory_space<vmem>>, %arg6: memref<1x1x8x8xbf16, #tpu.memory_space<vmem>>, %arg7: memref<8x1xf32, #tpu.memory_space<vmem>>, %arg8: memref<8x1xf32, #tpu.memory_space<vmem>>, %arg9: memref<8x8xf32, #tpu.memory_space<vmem>>) attributes {dimension_semantics = [#tpu.dimension_semantics<parallel>, #tpu.dimension_semantics<parallel>, #tpu.dimension_semantics<arbitrary>], iteration_bounds = array<i64: 2, 4, 1>, scalar_prefetch = 0 : i64, scratch_operands = 3 : i64, tpu.core_type = #tpu.core_type<tc>, window_params = [{transform_indices = @transform_0, window_bounds = array<i64: 1, 1, 8, 8>}, {transform_indices = @transform_1, window_bounds = array<i64: 1, 1, 8, 8>}, {transform_indices = @transform_2, window_bounds = array<i64: 1, 1, 8, 8>}, {transform_indices = @transform_3, window_bounds = array<i64: 1, 1, 8, 8>}]} {
    %c0_i32 = arith.constant 0 : i32
    %0 = arith.cmpi eq, %arg2, %c0_i32 : i32
    %1 = arith.extui %0 : i1 to i32
    %c0_i32_0 = arith.constant 0 : i32
    %2 = arith.cmpi ne, %1, %c0_i32_0 : i32
    scf.if %2 {
      %cst_29 = arith.constant 0xFF800000 : f32
      %36 = vector.broadcast %cst_29 : f32 to vector<8x1xf32>
      %c0_30 = arith.constant 0 : index
      %c0_31 = arith.constant 0 : index
      %37 = vector.load %arg7[%c0_30, %c0_31] : memref<8x1xf32, #tpu.memory_space<vmem>>, vector<8x1xf32>
      tpu.vector_store %arg7[%c0_30, %c0_31], %36 {strides = array<i32>} : memref<8x1xf32, #tpu.memory_space<vmem>>, vector<8x1xf32>,
      %cst_32 = arith.constant 0.000000e+00 : f32
      %38 = vector.broadcast %cst_32 : f32 to vector<8x1xf32>
      %c0_33 = arith.constant 0 : index
      %c0_34 = arith.constant 0 : index
      %39 = vector.load %arg8[%c0_33, %c0_34] : memref<8x1xf32, #tpu.memory_space<vmem>>, vector<8x1xf32>
      tpu.vector_store %arg8[%c0_33, %c0_34], %38 {strides = array<i32>} : memref<8x1xf32, #tpu.memory_space<vmem>>, vector<8x1xf32>,
      %cst_35 = arith.constant 0.000000e+00 : f32
      %40 = vector.broadcast %cst_35 : f32 to vector<8x8xf32>
      %c0_36 = arith.constant 0 : index
      %c0_37 = arith.constant 0 : index
      %41 = vector.load %arg9[%c0_36, %c0_37] : memref<8x8xf32, #tpu.memory_space<vmem>>, vector<8x8xf32>
      tpu.vector_store %arg9[%c0_36, %c0_37], %40 {strides = array<i32>} : memref<8x8xf32, #tpu.memory_space<vmem>>, vector<8x8xf32>,
    } else {
    }
    %c0 = arith.constant 0 : index
    %c0_1 = arith.constant 0 : index
    %c0_2 = arith.constant 0 : index
    %c0_3 = arith.constant 0 : index
    %3 = vector.load %arg3[%c0, %c0_1, %c0_2, %c0_3] : memref<1x1x8x8xbf16, #tpu.memory_space<vmem>>, vector<1x1x8x8xbf16>
    %4 = vector.shape_cast %3 : vector<1x1x8x8xbf16> to vector<8x8xbf16>
    %c0_4 = arith.constant 0 : index
    %c0_5 = arith.constant 0 : index
    %c0_6 = arith.constant 0 : index
    %c0_7 = arith.constant 0 : index
    %5 = vector.load %arg4[%c0_4, %c0_5, %c0_6, %c0_7] : memref<1x1x8x8xbf16, #tpu.memory_space<vmem>>, vector<1x1x8x8xbf16>
    %6 = vector.shape_cast %5 : vector<1x1x8x8xbf16> to vector<8x8xbf16>
    %c0_8 = arith.constant 0 : index
    %c0_9 = arith.constant 0 : index
    %c0_10 = arith.constant 0 : index
    %c0_11 = arith.constant 0 : index
    %7 = vector.load %arg5[%c0_8, %c0_9, %c0_10, %c0_11] : memref<1x1x8x8xbf16, #tpu.memory_space<vmem>>, vector<1x1x8x8xbf16>
    %8 = vector.shape_cast %7 : vector<1x1x8x8xbf16> to vector<8x8xbf16>
    %cst = arith.constant dense<0.000000e+00> : vector<8x8xf32>
    %9 = tpu.matmul %4, %6, %cst {dimension_numbers = #tpu.dot_dimension_numbers<[1], [1], [0], [0], [0, 0, 1, 0], [], []>} : vector<8x8xbf16>, vector<8x8xbf16>, vector<8x8xf32> -> vector<8x8xf32>
    %c0_12 = arith.constant 0 : index
    %c0_13 = arith.constant 0 : index
    %10 = vector.load %arg7[%c0_12, %c0_13] : memref<8x1xf32, #tpu.memory_space<vmem>>, vector<8x1xf32>
    %cst_14 = arith.constant dense<0xFF800000> : vector<8xf32>
    %11 = vector.multi_reduction <maximumf>, %9, %cst_14 [1] : vector<8x8xf32> to vector<8xf32>
    %12 = vector.shape_cast %11 : vector<8xf32> to vector<8x1xf32>
    %13 = arith.maximumf %10, %12 : vector<8x1xf32>
    %14 = arith.subf %10, %13 : vector<8x1xf32>
    %15 = math.exp %14 : vector<8x1xf32>
    %16 = vector.broadcast %13 : vector<8x1xf32> to vector<8x8xf32>
    %17 = arith.subf %9, %16 : vector<8x8xf32>
    %18 = math.exp %17 : vector<8x8xf32>
    %c0_15 = arith.constant 0 : index
    %c0_16 = arith.constant 0 : index
    %19 = vector.load %arg8[%c0_15, %c0_16] : memref<8x1xf32, #tpu.memory_space<vmem>>, vector<8x1xf32>
    %20 = arith.mulf %15, %19 : vector<8x1xf32>
    %cst_17 = arith.constant dense<0.000000e+00> : vector<8xf32>
    %21 = vector.multi_reduction <add>, %18, %cst_17 [1] : vector<8x8xf32> to vector<8xf32>
    %22 = vector.shape_cast %21 : vector<8xf32> to vector<8x1xf32>
    %23 = arith.addf %20, %22 : vector<8x1xf32>
    %c0_18 = arith.constant 0 : index
    %c0_19 = arith.constant 0 : index
    %24 = vector.load %arg8[%c0_18, %c0_19] : memref<8x1xf32, #tpu.memory_space<vmem>>, vector<8x1xf32>
    tpu.vector_store %arg8[%c0_18, %c0_19], %23 {strides = array<i32>} : memref<8x1xf32, #tpu.memory_space<vmem>>, vector<8x1xf32>,
    %c0_20 = arith.constant 0 : index
    %c0_21 = arith.constant 0 : index
    %25 = vector.load %arg9[%c0_20, %c0_21] : memref<8x8xf32, #tpu.memory_space<vmem>>, vector<8x8xf32>
    %26 = vector.broadcast %15 : vector<8x1xf32> to vector<8x8xf32>
    %27 = arith.mulf %26, %25 : vector<8x8xf32>
    %28 = arith.truncf %18 : vector<8x8xf32> to vector<8x8xbf16>
    %cst_22 = arith.constant dense<0.000000e+00> : vector<8x8xf32>
    %29 = tpu.matmul %28, %8, %cst_22 {dimension_numbers = #tpu.dot_dimension_numbers<[1], [0], [0], [1], [0, 0, 1, 1], [], []>} : vector<8x8xbf16>, vector<8x8xbf16>, vector<8x8xf32> -> vector<8x8xf32>
    %30 = arith.addf %27, %29 : vector<8x8xf32>
    %c0_23 = arith.constant 0 : index
    %c0_24 = arith.constant 0 : index
    %31 = vector.load %arg9[%c0_23, %c0_24] : memref<8x8xf32, #tpu.memory_space<vmem>>, vector<8x8xf32>
    tpu.vector_store %arg9[%c0_23, %c0_24], %30 {strides = array<i32>} : memref<8x8xf32, #tpu.memory_space<vmem>>, vector<8x8xf32>,
    %c0_25 = arith.constant 0 : index
    %c0_26 = arith.constant 0 : index
    %32 = vector.load %arg7[%c0_25, %c0_26] : memref<8x1xf32, #tpu.memory_space<vmem>>, vector<8x1xf32>
    tpu.vector_store %arg7[%c0_25, %c0_26], %13 {strides = array<i32>} : memref<8x1xf32, #tpu.memory_space<vmem>>, vector<8x1xf32>,
    %c0_i32_27 = arith.constant 0 : i32
    %33 = arith.cmpi eq, %arg2, %c0_i32_27 : i32
    %34 = arith.extui %33 : i1 to i32
    %c0_i32_28 = arith.constant 0 : i32
    %35 = arith.cmpi ne, %34, %c0_i32_28 : i32
    scf.if %35 {
      %c0_29 = arith.constant 0 : index
      %c0_30 = arith.constant 0 : index
      %36 = vector.load %arg9[%c0_29, %c0_30] : memref<8x8xf32, #tpu.memory_space<vmem>>, vector<8x8xf32>
      %c0_31 = arith.constant 0 : index
      %c0_32 = arith.constant 0 : index
      %37 = vector.load %arg8[%c0_31, %c0_32] : memref<8x1xf32, #tpu.memory_space<vmem>>, vector<8x1xf32>
      %38 = vector.broadcast %37 : vector<8x1xf32> to vector<8x8xf32>
      %39 = arith.divf %36, %38 : vector<8x8xf32>
      %40 = arith.truncf %39 : vector<8x8xf32> to vector<8x8xbf16>
      %c0_33 = arith.constant 0 : index
      %c0_34 = arith.constant 0 : index
      %c0_35 = arith.constant 0 : index
      %c0_36 = arith.constant 0 : index
      %41 = vector.load %arg6[%c0_33, %c0_34, %c0_35, %c0_36] : memref<1x1x8x8xbf16, #tpu.memory_space<vmem>>, vector<1x1x8x8xbf16>
      %42 = vector.shape_cast %41 : vector<1x1x8x8xbf16> to vector<8x8xbf16>
      %43 = vector.shape_cast %40 : vector<8x8xbf16> to vector<1x1x8x8xbf16>
      tpu.vector_store %arg6[%c0_33, %c0_34, %c0_35, %c0_36], %43 {strides = array<i32>} : memref<1x1x8x8xbf16, #tpu.memory_space<vmem>>, vector<1x1x8x8xbf16>,
    } else {
    }
    return
  }
  func.func @transform_0(%arg0: i32, %arg1: i32, %arg2: i32) -> (i32, i32, i32, i32) {
    %c0_i32 = arith.constant 0 : i32
    %c0_i32_0 = arith.constant 0 : i32
    %c0_i32_1 = arith.constant 0 : i32
    return %arg0, %arg1, %c0_i32, %c0_i32_0 : i32, i32, i32, i32
  }
  func.func @transform_1(%arg0: i32, %arg1: i32, %arg2: i32) -> (i32, i32, i32, i32) {
    %c0_i32 = arith.constant 0 : i32
    %c0_i32_0 = arith.constant 0 : i32
    return %arg0, %arg1, %arg2, %c0_i32 : i32, i32, i32, i32
  }
  func.func @transform_2(%arg0: i32, %arg1: i32, %arg2: i32) -> (i32, i32, i32, i32) {
    %c0_i32 = arith.constant 0 : i32
    %c0_i32_0 = arith.constant 0 : i32
    return %arg0, %arg1, %arg2, %c0_i32 : i32, i32, i32, i32
  }
  func.func @transform_3(%arg0: i32, %arg1: i32, %arg2: i32) -> (i32, i32, i32, i32) {
    %c0_i32 = arith.constant 0 : i32
    %c0_i32_0 = arith.constant 0 : i32
    %c0_i32_1 = arith.constant 0 : i32
    return %arg0, %arg1, %c0_i32, %c0_i32_0 : i32, i32, i32, i32
  }
}

module attributes {stable_mosaic.version = 11 : i64} {
  func.func @outproj_ffn_kernel(%arg0: i32, %arg1: memref<16x32xbf16, #tpu.memory_space<vmem>>, %arg2: memref<16x32xf32, #tpu.memory_space<vmem>>, %arg3: memref<32x32xbf16, #tpu.memory_space<vmem>>, %arg4: memref<1x32xf32, #tpu.memory_space<vmem>>, %arg5: memref<1x32xf32, #tpu.memory_space<vmem>>, %arg6: memref<1x32xf32, #tpu.memory_space<vmem>>, %arg7: memref<32x128xbf16, #tpu.memory_space<vmem>>, %arg8: memref<1x128xf32, #tpu.memory_space<vmem>>, %arg9: memref<128x32xbf16, #tpu.memory_space<vmem>>, %arg10: memref<1x32xf32, #tpu.memory_space<vmem>>, %arg11: memref<1x32xf32, #tpu.memory_space<vmem>>, %arg12: memref<1x32xf32, #tpu.memory_space<vmem>>, %arg13: memref<16x32xf32, #tpu.memory_space<vmem>>) attributes {dimension_semantics = [#tpu.dimension_semantics<parallel>], iteration_bounds = array<i64: 1>, scalar_prefetch = 0 : i64, scratch_operands = 0 : i64, tpu.core_type = #tpu.core_type<tc>, window_params = [{transform_indices = @transform_0, window_bounds = array<i64: 16, 32>}, {transform_indices = @transform_1, window_bounds = array<i64: 16, 32>}, {pipeline_mode = #tpu.pipeline_mode<synchronous>, transform_indices = @transform_2, window_bounds = array<i64: 32, 32>}, {pipeline_mode = #tpu.pipeline_mode<synchronous>, transform_indices = @transform_3, window_bounds = array<i64: 1, 32>}, {pipeline_mode = #tpu.pipeline_mode<synchronous>, transform_indices = @transform_4, window_bounds = array<i64: 1, 32>}, {pipeline_mode = #tpu.pipeline_mode<synchronous>, transform_indices = @transform_5, window_bounds = array<i64: 1, 32>}, {pipeline_mode = #tpu.pipeline_mode<synchronous>, transform_indices = @transform_6, window_bounds = array<i64: 32, 128>}, {pipeline_mode = #tpu.pipeline_mode<synchronous>, transform_indices = @transform_7, window_bounds = array<i64: 1, 128>}, {pipeline_mode = #tpu.pipeline_mode<synchronous>, transform_indices = @transform_8, window_bounds = array<i64: 128, 32>}, {pipeline_mode = #tpu.pipeline_mode<synchronous>, transform_indices = @transform_9, window_bounds = array<i64: 1, 32>}, {pipeline_mode = #tpu.pipeline_mode<synchronous>, transform_indices = @transform_10, window_bounds = array<i64: 1, 32>}, {pipeline_mode = #tpu.pipeline_mode<synchronous>, transform_indices = @transform_11, window_bounds = array<i64: 1, 32>}, {transform_indices = @transform_12, window_bounds = array<i64: 16, 32>}]} {
    %c0 = arith.constant 0 : index
    %c0_0 = arith.constant 0 : index
    %0 = vector.load %arg2[%c0, %c0_0] : memref<16x32xf32, #tpu.memory_space<vmem>>, vector<16x32xf32>
    %c0_1 = arith.constant 0 : index
    %c0_2 = arith.constant 0 : index
    %1 = vector.load %arg1[%c0_1, %c0_2] : memref<16x32xbf16, #tpu.memory_space<vmem>>, vector<16x32xbf16>
    %c0_3 = arith.constant 0 : index
    %c0_4 = arith.constant 0 : index
    %2 = vector.load %arg3[%c0_3, %c0_4] : memref<32x32xbf16, #tpu.memory_space<vmem>>, vector<32x32xbf16>
    %cst = arith.constant dense<0.000000e+00> : vector<16x32xf32>
    %3 = tpu.matmul %1, %2, %cst {dimension_numbers = #tpu.dot_dimension_numbers<[1], [0], [0], [1], [0, 0, 1, 1], [], []>} : vector<16x32xbf16>, vector<32x32xbf16>, vector<16x32xf32> -> vector<16x32xf32>
    %c0_5 = arith.constant 0 : index
    %c0_6 = arith.constant 0 : index
    %4 = vector.load %arg4[%c0_5, %c0_6] : memref<1x32xf32, #tpu.memory_space<vmem>>, vector<1x32xf32>
    %5 = vector.broadcast %4 : vector<1x32xf32> to vector<16x32xf32>
    %6 = arith.addf %3, %5 : vector<16x32xf32>
    %7 = arith.addf %0, %6 : vector<16x32xf32>
    %c0_7 = arith.constant 0 : index
    %c0_8 = arith.constant 0 : index
    %8 = vector.load %arg5[%c0_7, %c0_8] : memref<1x32xf32, #tpu.memory_space<vmem>>, vector<1x32xf32>
    %c0_9 = arith.constant 0 : index
    %c0_10 = arith.constant 0 : index
    %9 = vector.load %arg6[%c0_9, %c0_10] : memref<1x32xf32, #tpu.memory_space<vmem>>, vector<1x32xf32>
    %cst_11 = arith.constant dense<0.000000e+00> : vector<16xf32>
    %10 = vector.multi_reduction <add>, %7, %cst_11 [1] : vector<16x32xf32> to vector<16xf32>
    %11 = vector.shape_cast %10 : vector<16xf32> to vector<16x1xf32>
    %cst_12 = arith.constant 3.200000e+01 : f32
    %12 = vector.broadcast %cst_12 : f32 to vector<16x1xf32>
    %13 = arith.divf %11, %12 : vector<16x1xf32>
    %14 = vector.broadcast %13 : vector<16x1xf32> to vector<16x32xf32>
    %15 = arith.subf %7, %14 : vector<16x32xf32>
    %16 = arith.mulf %15, %15 : vector<16x32xf32>
    %cst_13 = arith.constant dense<0.000000e+00> : vector<16xf32>
    %17 = vector.multi_reduction <add>, %16, %cst_13 [1] : vector<16x32xf32> to vector<16xf32>
    %18 = vector.shape_cast %17 : vector<16xf32> to vector<16x1xf32>
    %cst_14 = arith.constant 3.200000e+01 : f32
    %19 = vector.broadcast %cst_14 : f32 to vector<16x1xf32>
    %20 = arith.divf %18, %19 : vector<16x1xf32>
    %21 = vector.broadcast %13 : vector<16x1xf32> to vector<16x32xf32>
    %22 = arith.subf %7, %21 : vector<16x32xf32>
    %cst_15 = arith.constant 9.99999974E-6 : f32
    %23 = vector.broadcast %cst_15 : f32 to vector<16x1xf32>
    %24 = arith.addf %20, %23 : vector<16x1xf32>
    %25 = math.rsqrt %24 : vector<16x1xf32>
    %26 = vector.broadcast %25 : vector<16x1xf32> to vector<16x32xf32>
    %27 = arith.mulf %22, %26 : vector<16x32xf32>
    %28 = vector.broadcast %8 : vector<1x32xf32> to vector<16x32xf32>
    %29 = arith.mulf %27, %28 : vector<16x32xf32>
    %30 = vector.broadcast %9 : vector<1x32xf32> to vector<16x32xf32>
    %31 = arith.addf %29, %30 : vector<16x32xf32>
    %32 = arith.truncf %31 : vector<16x32xf32> to vector<16x32xbf16>
    %c0_16 = arith.constant 0 : index
    %c0_17 = arith.constant 0 : index
    %33 = vector.load %arg7[%c0_16, %c0_17] : memref<32x128xbf16, #tpu.memory_space<vmem>>, vector<32x128xbf16>
    %cst_18 = arith.constant dense<0.000000e+00> : vector<16x128xf32>
    %34 = tpu.matmul %32, %33, %cst_18 {dimension_numbers = #tpu.dot_dimension_numbers<[1], [0], [0], [1], [0, 0, 1, 1], [], []>} : vector<16x32xbf16>, vector<32x128xbf16>, vector<16x128xf32> -> vector<16x128xf32>
    %c0_19 = arith.constant 0 : index
    %c0_20 = arith.constant 0 : index
    %35 = vector.load %arg8[%c0_19, %c0_20] : memref<1x128xf32, #tpu.memory_space<vmem>>, vector<1x128xf32>
    %36 = vector.broadcast %35 : vector<1x128xf32> to vector<16x128xf32>
    %37 = arith.addf %34, %36 : vector<16x128xf32>
    %cst_21 = arith.constant 0.000000e+00 : f32
    %38 = vector.broadcast %cst_21 : f32 to vector<16x128xf32>
    %39 = arith.maximumf %37, %38 : vector<16x128xf32>
    %40 = arith.truncf %39 : vector<16x128xf32> to vector<16x128xbf16>
    %c0_22 = arith.constant 0 : index
    %c0_23 = arith.constant 0 : index
    %41 = vector.load %arg9[%c0_22, %c0_23] : memref<128x32xbf16, #tpu.memory_space<vmem>>, vector<128x32xbf16>
    %cst_24 = arith.constant dense<0.000000e+00> : vector<16x32xf32>
    %42 = tpu.matmul %40, %41, %cst_24 {dimension_numbers = #tpu.dot_dimension_numbers<[1], [0], [0], [1], [0, 0, 1, 1], [], []>} : vector<16x128xbf16>, vector<128x32xbf16>, vector<16x32xf32> -> vector<16x32xf32>
    %c0_25 = arith.constant 0 : index
    %c0_26 = arith.constant 0 : index
    %43 = vector.load %arg10[%c0_25, %c0_26] : memref<1x32xf32, #tpu.memory_space<vmem>>, vector<1x32xf32>
    %44 = vector.broadcast %43 : vector<1x32xf32> to vector<16x32xf32>
    %45 = arith.addf %42, %44 : vector<16x32xf32>
    %46 = arith.addf %31, %45 : vector<16x32xf32>
    %c0_27 = arith.constant 0 : index
    %c0_28 = arith.constant 0 : index
    %47 = vector.load %arg11[%c0_27, %c0_28] : memref<1x32xf32, #tpu.memory_space<vmem>>, vector<1x32xf32>
    %c0_29 = arith.constant 0 : index
    %c0_30 = arith.constant 0 : index
    %48 = vector.load %arg12[%c0_29, %c0_30] : memref<1x32xf32, #tpu.memory_space<vmem>>, vector<1x32xf32>
    %cst_31 = arith.constant dense<0.000000e+00> : vector<16xf32>
    %49 = vector.multi_reduction <add>, %46, %cst_31 [1] : vector<16x32xf32> to vector<16xf32>
    %50 = vector.shape_cast %49 : vector<16xf32> to vector<16x1xf32>
    %cst_32 = arith.constant 3.200000e+01 : f32
    %51 = vector.broadcast %cst_32 : f32 to vector<16x1xf32>
    %52 = arith.divf %50, %51 : vector<16x1xf32>
    %53 = vector.broadcast %52 : vector<16x1xf32> to vector<16x32xf32>
    %54 = arith.subf %46, %53 : vector<16x32xf32>
    %55 = arith.mulf %54, %54 : vector<16x32xf32>
    %cst_33 = arith.constant dense<0.000000e+00> : vector<16xf32>
    %56 = vector.multi_reduction <add>, %55, %cst_33 [1] : vector<16x32xf32> to vector<16xf32>
    %57 = vector.shape_cast %56 : vector<16xf32> to vector<16x1xf32>
    %cst_34 = arith.constant 3.200000e+01 : f32
    %58 = vector.broadcast %cst_34 : f32 to vector<16x1xf32>
    %59 = arith.divf %57, %58 : vector<16x1xf32>
    %60 = vector.broadcast %52 : vector<16x1xf32> to vector<16x32xf32>
    %61 = arith.subf %46, %60 : vector<16x32xf32>
    %cst_35 = arith.constant 9.99999974E-6 : f32
    %62 = vector.broadcast %cst_35 : f32 to vector<16x1xf32>
    %63 = arith.addf %59, %62 : vector<16x1xf32>
    %64 = math.rsqrt %63 : vector<16x1xf32>
    %65 = vector.broadcast %64 : vector<16x1xf32> to vector<16x32xf32>
    %66 = arith.mulf %61, %65 : vector<16x32xf32>
    %67 = vector.broadcast %47 : vector<1x32xf32> to vector<16x32xf32>
    %68 = arith.mulf %66, %67 : vector<16x32xf32>
    %69 = vector.broadcast %48 : vector<1x32xf32> to vector<16x32xf32>
    %70 = arith.addf %68, %69 : vector<16x32xf32>
    %c0_36 = arith.constant 0 : index
    %c0_37 = arith.constant 0 : index
    %71 = vector.load %arg13[%c0_36, %c0_37] : memref<16x32xf32, #tpu.memory_space<vmem>>, vector<16x32xf32>
    tpu.vector_store %arg13[%c0_36, %c0_37], %70 {strides = array<i32>} : memref<16x32xf32, #tpu.memory_space<vmem>>, vector<16x32xf32>,
    return
  }
  func.func @transform_0(%arg0: i32) -> (i32, i32) {
    %c0_i32 = arith.constant 0 : i32
    %c0_i32_0 = arith.constant 0 : i32
    return %arg0, %c0_i32 : i32, i32
  }
  func.func @transform_1(%arg0: i32) -> (i32, i32) {
    %c0_i32 = arith.constant 0 : i32
    %c0_i32_0 = arith.constant 0 : i32
    return %arg0, %c0_i32 : i32, i32
  }
  func.func @transform_2(%arg0: i32) -> (i32, i32) {
    %c0_i32 = arith.constant 0 : i32
    %c0_i32_0 = arith.constant 0 : i32
    %c0_i32_1 = arith.constant 0 : i32
    return %c0_i32, %c0_i32_0 : i32, i32
  }
  func.func @transform_3(%arg0: i32) -> (i32, i32) {
    %c0_i32 = arith.constant 0 : i32
    %c0_i32_0 = arith.constant 0 : i32
    %c0_i32_1 = arith.constant 0 : i32
    return %c0_i32, %c0_i32_0 : i32, i32
  }
  func.func @transform_4(%arg0: i32) -> (i32, i32) {
    %c0_i32 = arith.constant 0 : i32
    %c0_i32_0 = arith.constant 0 : i32
    %c0_i32_1 = arith.constant 0 : i32
    return %c0_i32, %c0_i32_0 : i32, i32
  }
  func.func @transform_5(%arg0: i32) -> (i32, i32) {
    %c0_i32 = arith.constant 0 : i32
    %c0_i32_0 = arith.constant 0 : i32
    %c0_i32_1 = arith.constant 0 : i32
    return %c0_i32, %c0_i32_0 : i32, i32
  }
  func.func @transform_6(%arg0: i32) -> (i32, i32) {
    %c0_i32 = arith.constant 0 : i32
    %c0_i32_0 = arith.constant 0 : i32
    %c0_i32_1 = arith.constant 0 : i32
    return %c0_i32, %c0_i32_0 : i32, i32
  }
  func.func @transform_7(%arg0: i32) -> (i32, i32) {
    %c0_i32 = arith.constant 0 : i32
    %c0_i32_0 = arith.constant 0 : i32
    %c0_i32_1 = arith.constant 0 : i32
    return %c0_i32, %c0_i32_0 : i32, i32
  }
  func.func @transform_8(%arg0: i32) -> (i32, i32) {
    %c0_i32 = arith.constant 0 : i32
    %c0_i32_0 = arith.constant 0 : i32
    %c0_i32_1 = arith.constant 0 : i32
    return %c0_i32, %c0_i32_0 : i32, i32
  }
  func.func @transform_9(%arg0: i32) -> (i32, i32) {
    %c0_i32 = arith.constant 0 : i32
    %c0_i32_0 = arith.constant 0 : i32
    %c0_i32_1 = arith.constant 0 : i32
    return %c0_i32, %c0_i32_0 : i32, i32
  }
  func.func @transform_10(%arg0: i32) -> (i32, i32) {
    %c0_i32 = arith.constant 0 : i32
    %c0_i32_0 = arith.constant 0 : i32
    %c0_i32_1 = arith.constant 0 : i32
    return %c0_i32, %c0_i32_0 : i32, i32
  }
  func.func @transform_11(%arg0: i32) -> (i32, i32) {
    %c0_i32 = arith.constant 0 : i32
    %c0_i32_0 = arith.constant 0 : i32
    %c0_i32_1 = arith.constant 0 : i32
    return %c0_i32, %c0_i32_0 : i32, i32
  }
  func.func @transform_12(%arg0: i32) -> (i32, i32) {
    %c0_i32 = arith.constant 0 : i32
    %c0_i32_0 = arith.constant 0 : i32
    return %arg0, %c0_i32 : i32, i32
  }
}

module attributes {stable_mosaic.version = 11 : i64} {
  func.func @linear_kernel(%arg0: i32, %arg1: i32, %arg2: memref<16x32xbf16, #tpu.memory_space<vmem>>, %arg3: memref<32x128xbf16, #tpu.memory_space<vmem>>, %arg4: memref<1x128xf32, #tpu.memory_space<vmem>>, %arg5: memref<16x128xf32, #tpu.memory_space<vmem>>) attributes {dimension_semantics = [#tpu.dimension_semantics<parallel>, #tpu.dimension_semantics<parallel>], iteration_bounds = array<i64: 1, 1>, scalar_prefetch = 0 : i64, scratch_operands = 0 : i64, tpu.core_type = #tpu.core_type<tc>, window_params = [{transform_indices = @transform_0, window_bounds = array<i64: 16, 32>}, {transform_indices = @transform_1, window_bounds = array<i64: 32, 128>}, {transform_indices = @transform_2, window_bounds = array<i64: 1, 128>}, {transform_indices = @transform_3, window_bounds = array<i64: 16, 128>}]} {
    %c0 = arith.constant 0 : index
    %c0_0 = arith.constant 0 : index
    %0 = vector.load %arg2[%c0, %c0_0] : memref<16x32xbf16, #tpu.memory_space<vmem>>, vector<16x32xbf16>
    %c0_1 = arith.constant 0 : index
    %c0_2 = arith.constant 0 : index
    %1 = vector.load %arg3[%c0_1, %c0_2] : memref<32x128xbf16, #tpu.memory_space<vmem>>, vector<32x128xbf16>
    %cst = arith.constant dense<0.000000e+00> : vector<16x128xf32>
    %2 = tpu.matmul %0, %1, %cst {dimension_numbers = #tpu.dot_dimension_numbers<[1], [0], [0], [1], [0, 0, 1, 1], [], []>} : vector<16x32xbf16>, vector<32x128xbf16>, vector<16x128xf32> -> vector<16x128xf32>
    %c0_3 = arith.constant 0 : index
    %c0_4 = arith.constant 0 : index
    %3 = vector.load %arg4[%c0_3, %c0_4] : memref<1x128xf32, #tpu.memory_space<vmem>>, vector<1x128xf32>
    %4 = vector.broadcast %3 : vector<1x128xf32> to vector<16x128xf32>
    %5 = arith.addf %2, %4 : vector<16x128xf32>
    %c0_5 = arith.constant 0 : index
    %c0_6 = arith.constant 0 : index
    %6 = vector.load %arg5[%c0_5, %c0_6] : memref<16x128xf32, #tpu.memory_space<vmem>>, vector<16x128xf32>
    tpu.vector_store %arg5[%c0_5, %c0_6], %5 {strides = array<i32>} : memref<16x128xf32, #tpu.memory_space<vmem>>, vector<16x128xf32>,
    return
  }
  func.func @transform_0(%arg0: i32, %arg1: i32) -> (i32, i32) {
    %c0_i32 = arith.constant 0 : i32
    %c0_i32_0 = arith.constant 0 : i32
    return %arg0, %c0_i32 : i32, i32
  }
  func.func @transform_1(%arg0: i32, %arg1: i32) -> (i32, i32) {
    %c0_i32 = arith.constant 0 : i32
    %c0_i32_0 = arith.constant 0 : i32
    return %c0_i32, %arg1 : i32, i32
  }
  func.func @transform_2(%arg0: i32, %arg1: i32) -> (i32, i32) {
    %c0_i32 = arith.constant 0 : i32
    %c0_i32_0 = arith.constant 0 : i32
    return %c0_i32, %arg1 : i32, i32
  }
  func.func @transform_3(%arg0: i32, %arg1: i32) -> (i32, i32) {
    %c0_i32 = arith.constant 0 : i32
    return %arg0, %arg1 : i32, i32
  }
}

</mosaic_0001>

<llo_original>
// kernel: huobz_transformer_forward.7
$region0: #{huobz_transformer_forward.7}
  #allocation0 [shape = 'u32[]', space=smem, size = 0x4, offset = 0x4, fixed_abs, tag = 'smem constant byte address 0x4 - core index']
  #allocation1 [shape = 'u32[144,128]{1,0:T(1,128)}', space=vmem, size = 0x12000, scoped, tag = 'internal scratch']
  %s0 = inlined_call_operand.vmem [shape: f32[16,32], index: 0, kind: input, shape index: {}]
  %s1 = inlined_call_operand.vmem [shape: bf16[32,96], index: 1, kind: input, shape index: {}]
  %s2 = inlined_call_operand.vmem [shape: f32[1,96], index: 2, kind: input, shape index: {}]
  %s3 = inlined_call_operand.vmem [shape: bf16[16,96], index: 3, kind: output, shape index: {}]
  %s4 = sld [smem:[#allocation0]]
  $region22: #{huobz_transformer_forward.7} parent=0
    _
  %s6 = ssub.s32 1, %s4
  %s7 = scalar_select 0, %s6, %s4
  // Predicated region
  $region2: #{huobz_transformer_forward.7} parent=0 // pred_check
    _
  $region3: #{huobz_transformer_forward.7} parent=0 // pred_check_branch
    %9 = sbr.rel (0) target = $region5
  $region4: #{huobz_transformer_forward.7} parent=0 // pred_region
    _
  $region5: #{huobz_transformer_forward.7} parent=0 // pred_fallthru
    _
  // Predicated region
  $region6: #{huobz_transformer_forward.7} parent=0 // pred_check
    _
  $region7: #{huobz_transformer_forward.7} parent=0 // pred_check_branch
    %11 = sbr.rel (0) target = $region9
  $region8: #{huobz_transformer_forward.7} parent=0 // pred_region
    _
  $region9: #{huobz_transformer_forward.7} parent=0 // pred_fallthru
    _
  // Predicated region
  $region10: #{huobz_transformer_forward.7} parent=0 // pred_check
    _
  $region11: #{huobz_transformer_forward.7} parent=0 // pred_check_branch
    %13 = sbr.rel (0) target = $region13
  $region12: #{huobz_transformer_forward.7} parent=0 // pred_region
    _
  $region13: #{huobz_transformer_forward.7} parent=0 // pred_fallthru
    _
  %v15 = vld [vmem:[%s0] sm:$0xff]
  %v16 = vld [vmem:[%s0 + $0x8] sm:$0xff]
  %v17 = vpack.c.bf16 %v16, %v15
  %v18 = vld [vmem:[%s1] sm:$0xf]
  %v19 = vld [vmem:[%s1 + $0x4] sm:$0xf]
  %v20 = vld [vmem:[%s1 + $0x8] sm:$0xf]
  %v21 = vld [vmem:[%s1 + $0xc] sm:$0xf]
  %v22 = vld [vmem:[%s2] sm:$0x1]
  %v24 = vlaneseq
  %v25 = vshrl.u32 %v24, 7
  %v26 = vsub.s32 0, %v25
  %v27 = vrot.slane %v22, %v26
  %v33 = vunpack.c.l.b16 %v18
  %v34 = vunpack.c.l.b16 %v19
  %v35 = vunpack.c.l.b16 %v20
  %v36 = vunpack.c.l.b16 %v21
  %v37 = vpack.c.b16 %v34, %v33
  %v38 = vpack.c.b16 %v36, %v35
  %vm41 = vcmask 261120
  %v43 = vsel %vm41, %v17, 0
  %45 = vmatprep.subr.bf16.mxu0 0
  %46 = vmatpush1.bf16.msra.mxu0 0
  %47 = vmatprep.subr.bf16.mxu0 0
  %48 = vmatpush1.bf16.msra.mxu0 0
  %49 = vmatprep.subr.bf16.mxu0 0
  %50 = vmatpush1.bf16.msra.mxu0 0
  %51 = vmatprep.subr.bf16.mxu0 0
  %52 = vmatpush1.bf16.msra.mxu0 0
  %53 = vmatprep.subr.bf16.mxu0 0
  %54 = vmatpush1.bf16.msra.mxu0 0
  %55 = vmatprep.subr.bf16.mxu0 0
  %56 = vmatpush1.bf16.msra.mxu0 0
  %57 = vmatprep.subr.bf16.mxu0 0
  %58 = vmatpush1.bf16.msra.mxu0 %v38
  %59 = vmatprep.subr.bf16.mxu0 0
  %60 = vmatpush1.bf16.msra.mxu0 %v37
  %61 = vmatprep.subr.bf16.mxu0 0
  %62 = vmatpush2.bf16.msra.mxu0 0
  %63 = vmatprep.subr.bf16.mxu0 0
  %64 = vmatpush2.bf16.msra.mxu0 0
  %65 = vmatprep.subr.bf16.mxu0 0
  %66 = vmatpush2.bf16.msra.mxu0 0
  %67 = vmatprep.subr.bf16.mxu0 0
  %68 = vmatpush2.bf16.msra.mxu0 0
  %69 = vmatprep.subr.bf16.mxu0 0
  %70 = vmatpush2.bf16.msra.mxu0 0
  %71 = vmatprep.subr.bf16.mxu0 0
  %72 = vmatpush2.bf16.msra.mxu0 0
  %73 = vmatprep.subr.bf16.mxu0 0
  %74 = vmatpush2.bf16.msra.mxu0 0
  %75 = vmatprep.subr.bf16.mxu0 0
  %76 = vmatpush2.bf16.msra.mxu0 0
  %77 = vmatprep.mubr.bf16.mxu0 0
  %78 = vmatmul.mubr.bf16.gmra.mxu0 %v43
  %v79 = vpop.f32.mrf.mxu0
  %v80 = vadd.f32 %v27, %v79
  %v81 = vpop.f32.mrf.mxu0
  %v82 = vpop.f32.mrf.mxu0
  %v83 = vadd.f32 %v27, %v82
  %v84 = vpop.f32.mrf.mxu0
  %85 = vdwg.mxu0
  %v86 = vpack.c.bf16 %v83, %v80
  %v88 = vunpack.c.l.b16 %v86
  %v89 = vunpack.c.h.b16 %v86
  %v90 = vpack.c.b16 %v88, %v88
  %v91 = vpack.c.b16 %v89, %v89
  %vm94 = vcmask 781312
  %95 = vst.msk [vmem:[%s3] sm:$0xf] %vm94, %v90
  %96 = vst.msk [vmem:[%s3 + $0x4] sm:$0xf] %vm94, %v91
  // Predicated region
  $region14: #{huobz_transformer_forward.7} parent=0 // pred_check
    _
  $region15: #{huobz_transformer_forward.7} parent=0 // pred_check_branch
    %98 = sbr.rel (0) target = $region17
  $region16: #{huobz_transformer_forward.7} parent=0 // pred_region
    _
  $region17: #{huobz_transformer_forward.7} parent=0 // pred_fallthru
    _
  // Predicated region
  $region18: #{huobz_transformer_forward.7} parent=0 // pred_check
    _
  $region19: #{huobz_transformer_forward.7} parent=0 // pred_check_branch
    %100 = sbr.rel (0) target = $region21
  $region20: #{huobz_transformer_forward.7} parent=0 // pred_region
    _
  $region21: #{huobz_transformer_forward.7} parent=0 // pred_fallthru
    _

// kernel: huobz_transformer_forward.8
$region0: #{huobz_transformer_forward.8}
  #allocation0 [shape = 'u32[]', space=smem, size = 0x4, offset = 0x4, fixed_abs, tag = 'smem constant byte address 0x4 - core index']
  #allocation1 [shape = 'u32[144,128]{1,0:T(1,128)}', space=vmem, size = 0x12000, scoped, tag = 'internal scratch']
  #allocation2 [shape = 'f32[8,1]{1,0:T(8,128)}', space=vmem, size = 0x1000, scoped, tag = 'scratch operand']
  #allocation3 [shape = 'f32[8,1]{1,0:T(8,128)}', space=vmem, size = 0x1000, scoped, tag = 'scratch operand']
  #allocation4 [shape = 'f32[8,8]{1,0:T(8,128)}', space=vmem, size = 0x1000, scoped, tag = 'scratch operand']
  %s0 = inlined_call_operand.vmem [shape: bf16[2,4,8,8], index: 0, kind: input, shape index: {}]
  %s1 = inlined_call_operand.vmem [shape: bf16[2,4,8,8], index: 1, kind: input, shape index: {}]
  %s2 = inlined_call_operand.vmem [shape: bf16[2,4,8,8], index: 2, kind: input, shape index: {}]
  %s3 = inlined_call_operand.vmem [shape: bf16[2,4,8,8], index: 3, kind: output, shape index: {}]
  %s4 = sld [smem:[#allocation0]]
  $region53: #{huobz_transformer_forward.8} parent=0
    _
  %s6 = ssub.s32 1, %s4
  %s7 = scalar_select 0, %s6, %s4
  loop: start=0, step=1, limit=10
  $region2: #{huobz_transformer_forward.8} parent=0 // loop_pre_header
    _
  $region3: #{huobz_transformer_forward.8} parent=0 // loop_header
    %s9 = sphi 0, %s13
    %p10 = scmp.ge.s32.totalorder %s9, 10
    %s16 = sphi 0, %s35
    %s17 = sphi 0, %s31
    %s18 = sphi 0, %s27
    %s19 = sphi 0, %s16
    %s20 = sphi 0, %s17
    %s21 = sphi 0, %s18
    %s22 = sphi 0, %s19
    %s23 = sphi 0, %s20
    %s24 = sphi 0, %s21
    %s40 = sphi 0, %s42
    %s43 = sphi 0, %s40
    %s44 = sphi 0, %s43
    %s60 = sphi 0, %s44
    %s70 = sphi 0, %s72
    %s73 = sphi 0, %s70
    %s74 = sphi 0, %s73
    %s90 = sphi 0, %s74
    %s100 = sphi 0, %s102
    %s103 = sphi 0, %s100
    %s104 = sphi 0, %s103
    %s120 = sphi 0, %s104
    %s128 = sphi 0, %s130
    %s131 = sphi 0, %s128
    %s132 = sphi 0, %s131
    %s148 = sphi 0, %s132
  $region4: #{huobz_transformer_forward.8} parent=0 // loop_header_branch
    %12 = sbr.rel (%p10) target = $region8
  $region5: #{huobz_transformer_forward.8} parent=0 // loop_body
    %s14 = ssub.s32 %s9, 1
    %s15 = ssub.s32 %s9, 2
    %s25 = sadd.s32 1, %s18
    %p26 = scmp.ge.s32.totalorder %s25, 1
    %s27 = scalar_select %p26, 0, %s25
    %s28 = sadd.s32 1, %s17
    %s29 = scalar_select %p26, %s28, %s17
    %p30 = scmp.ge.s32.totalorder %s29, 4
    %s31 = scalar_select %p30, 0, %s29
    %s32 = sadd.s32 1, %s16
    %s33 = scalar_select %p30, %s32, %s16
    %p34 = scmp.ge.s32.totalorder %s33, 2
    %s35 = scalar_select %p34, 0, %s33
    %s36 = ssub.s32 %s16, %s35
    %s37 = ssub.s32 %s17, %s31
    %s38 = sor.u32 %s36, %s37
    %p39 = scmp.eq.s32.totalorder %s38, 0
    %s41 = sadd.s32 %s40, 1
    %s42 = scalar_select %p39, %s40, %s41
    %p45 = pneg %p39
    %p46 = scmp.eq.s32.totalorder %s9, 7
    %p47 = por %p45, %p46
    %p48 = scmp.ne.s32.totalorder %s40, %s43
    %p49 = scmp.eq.s32.totalorder %s9, 0
    %p50 = por %p48, %p49
    %p51 = scmp.ne.s32.totalorder %s40, %s43
    %p52 = scmp.eq.s32.totalorder %s14, 7
    %p53 = por %p51, %p52
    %p54 = scmp.ne.s32.totalorder %s43, %s44
    %p55 = scmp.eq.s32.totalorder %s14, 0
    %p56 = por %p54, %p55
    %p57 = scmp.ne.s32.totalorder %s43, %s44
    %p58 = scmp.eq.s32.totalorder %s15, 7
    %p59 = por %p57, %p58
    %p61 = scmp.ne.s32.totalorder %s44, %s60
    %p62 = scmp.eq.s32.totalorder %s15, 0
    %p63 = por %p61, %p62
    %s64 = ssub.s32 %s16, %s35
    %s65 = ssub.s32 %s17, %s31
    %s66 = sor.u32 %s64, %s65
    %s67 = ssub.s32 %s18, %s27
    %s68 = sor.u32 %s66, %s67
    %p69 = scmp.eq.s32.totalorder %s68, 0
    %s71 = sadd.s32 %s70, 1
    %s72 = scalar_select %p69, %s70, %s71
    %p75 = pneg %p69
    %p76 = scmp.eq.s32.totalorder %s9, 7
    %p77 = por %p75, %p76
    %p78 = scmp.ne.s32.totalorder %s70, %s73
    %p79 = scmp.eq.s32.totalorder %s9, 0
    %p80 = por %p78, %p79
    %p81 = scmp.ne.s32.totalorder %s70, %s73
    %p82 = scmp.eq.s32.totalorder %s14, 7
    %p83 = por %p81, %p82
    %p84 = scmp.ne.s32.totalorder %s73, %s74
    %p85 = scmp.eq.s32.totalorder %s14, 0
    %p86 = por %p84, %p85
    %p87 = scmp.ne.s32.totalorder %s73, %s74
    %p88 = scmp.eq.s32.totalorder %s15, 7
    %p89 = por %p87, %p88
    %p91 = scmp.ne.s32.totalorder %s74, %s90
    %p92 = scmp.eq.s32.totalorder %s15, 0
    %p93 = por %p91, %p92
    %s94 = ssub.s32 %s16, %s35
    %s95 = ssub.s32 %s17, %s31
    %s96 = sor.u32 %s94, %s95
    %s97 = ssub.s32 %s18, %s27
    %s98 = sor.u32 %s96, %s97
    %p99 = scmp.eq.s32.totalorder %s98, 0
    %s101 = sadd.s32 %s100, 1
    %s102 = scalar_select %p99, %s100, %s101
    %p105 = pneg %p99
    %p106 = scmp.eq.s32.totalorder %s9, 7
    %p107 = por %p105, %p106
    %p108 = scmp.ne.s32.totalorder %s100, %s103
    %p109 = scmp.eq.s32.totalorder %s9, 0
    %p110 = por %p108, %p109
    %p111 = scmp.ne.s32.totalorder %s100, %s103
    %p112 = scmp.eq.s32.totalorder %s14, 7
    %p113 = por %p111, %p112
    %p114 = scmp.ne.s32.totalorder %s103, %s104
    %p115 = scmp.eq.s32.totalorder %s14, 0
    %p116 = por %p114, %p115
    %p117 = scmp.ne.s32.totalorder %s103, %s104
    %p118 = scmp.eq.s32.totalorder %s15, 7
    %p119 = por %p117, %p118
    %p121 = scmp.ne.s32.totalorder %s104, %s120
    %p122 = scmp.eq.s32.totalorder %s15, 0
    %p123 = por %p121, %p122
    %s124 = ssub.s32 %s16, %s35
    %s125 = ssub.s32 %s17, %s31
    %s126 = sor.u32 %s124, %s125
    %p127 = scmp.eq.s32.totalorder %s126, 0
    %s129 = sadd.s32 %s128, 1
    %s130 = scalar_select %p127, %s128, %s129
    %p133 = pneg %p127
    %p134 = scmp.eq.s32.totalorder %s9, 7
    %p135 = por %p133, %p134
    %p136 = scmp.ne.s32.totalorder %s128, %s131
    %p137 = scmp.eq.s32.totalorder %s9, 0
    %p138 = por %p136, %p137
    %p139 = scmp.ne.s32.totalorder %s128, %s131
    %p140 = scmp.eq.s32.totalorder %s14, 7
    %p141 = por %p139, %p140
    %p142 = scmp.ne.s32.totalorder %s131, %s132
    %p143 = scmp.eq.s32.totalorder %s14, 0
    %p144 = por %p142, %p143
    %p145 = scmp.ne.s32.totalorder %s131, %s132
    %p146 = scmp.eq.s32.totalorder %s15, 7
    %p147 = por %p145, %p146
    %p149 = scmp.ne.s32.totalorder %s132, %s148
    %p150 = scmp.eq.s32.totalorder %s15, 0
    %p151 = por %p149, %p150
    %p152 = scmp.le.s32.totalorder 1, %s9
    %p153 = scmp.lt.s32.totalorder %s9, 9
    %p154 = pnand %p152, %p153
    %p155 = pneg %p154
    // Predicated region
    $region9: #{huobz_transformer_forward.8} parent=5 // pred_check
      _
    $region10: #{huobz_transformer_forward.8} parent=5 // pred_check_branch
      %157 = sbr.rel (%p154) target = $region12
    $region11: #{huobz_transformer_forward.8} parent=5 // pred_region
      %s158 = ssub.s32 %s9, 1
    $region12: #{huobz_transformer_forward.8} parent=5 // pred_fallthru
      _
    %p159 = scmp.lt.s32.totalorder %s9, 8
    // Predicated region
    $region13: #{huobz_transformer_forward.8} parent=5 // pred_check
      %p160 = pneg %p159
    $region14: #{huobz_transformer_forward.8} parent=5 // pred_check_branch
      %162 = sbr.rel (%p160) target = $region16
    $region15: #{huobz_transformer_forward.8} parent=5 // pred_region
      // Predicated region
      $region17: #{huobz_transformer_forward.8} parent=15 // pred_check
        %p163 = pneg %p50
      $region18: #{huobz_transformer_forward.8} parent=15 // pred_check_branch
        %165 = sbr.rel (%p163) target = $region20
      $region19: #{huobz_transformer_forward.8} parent=15 // pred_region
        %p166 = scmp.lt.s32.totalorder %s16, 1
        %s167 = scalar_select %p166, %s16, 1
        %p168 = scmp.lt.s32.totalorder %s17, 3
        %s169 = scalar_select %p168, %s17, 3
        %s170 = smul.addr %s167, 4
        %s171 = sadd.s32 %s169, %s170
        %s172 = smul.addr %s171, 4
        %s173 = scalar_lea.vmem %s0, %s172
      $region20: #{huobz_transformer_forward.8} parent=15 // pred_fallthru
        _
      // Predicated region
      $region21: #{huobz_transformer_forward.8} parent=15 // pred_check
        %p174 = pneg %p80
      $region22: #{huobz_transformer_forward.8} parent=15 // pred_check_branch
        %176 = sbr.rel (%p174) target = $region24
      $region23: #{huobz_transformer_forward.8} parent=15 // pred_region
        %p177 = scmp.lt.s32.totalorder %s16, 1
        %s178 = scalar_select %p177, %s16, 1
        %p179 = scmp.lt.s32.totalorder %s17, 3
        %s180 = scalar_select %p179, %s17, 3
        %p181 = scmp.lt.s32.totalorder %s18, 0
        %s182 = scalar_select %p181, %s18, 0
        %s183 = sadd.s32 %s182, %s180
        %s184 = smul.addr %s178, 4
        %s185 = sadd.s32 %s183, %s184
        %s186 = smul.addr %s185, 4
        %s187 = scalar_lea.vmem %s1, %s186
      $region24: #{huobz_transformer_forward.8} parent=15 // pred_fallthru
        _
      // Predicated region
      $region25: #{huobz_transformer_forward.8} parent=15 // pred_check
        %p188 = pneg %p110
      $region26: #{huobz_transformer_forward.8} parent=15 // pred_check_branch
        %190 = sbr.rel (%p188) target = $region28
      $region27: #{huobz_transformer_forward.8} parent=15 // pred_region
        %p191 = scmp.lt.s32.totalorder %s16, 1
        %s192 = scalar_select %p191, %s16, 1
        %p193 = scmp.lt.s32.totalorder %s17, 3
        %s194 = scalar_select %p193, %s17, 3
        %p195 = scmp.lt.s32.totalorder %s18, 0
        %s196 = scalar_select %p195, %s18, 0
        %s197 = sadd.s32 %s196, %s194
        %s198 = smul.addr %s192, 4
        %s199 = sadd.s32 %s197, %s198
        %s200 = smul.addr %s199, 4
        %s201 = scalar_lea.vmem %s2, %s200
      $region28: #{huobz_transformer_forward.8} parent=15 // pred_fallthru
        _
    $region16: #{huobz_transformer_forward.8} parent=5 // pred_fallthru
      _
    %p202 = scmp.le.s32.totalorder 1, %s9
    %p203 = scmp.lt.s32.totalorder %s9, 9
    %p204 = pnand %p202, %p203
    %p205 = pneg %p204
    // Predicated region
    $region29: #{huobz_transformer_forward.8} parent=5 // pred_check
      _
    $region30: #{huobz_transformer_forward.8} parent=5 // pred_check_branch
      %207 = sbr.rel (%p204) target = $region32
    $region31: #{huobz_transformer_forward.8} parent=5 // pred_region
      %s208 = ssub.s32 %s9, 1
      %p209 = scmp.lt.s32.totalorder %s19, 1
      %s210 = scalar_select %p209, %s19, 1
      %p211 = scmp.lt.s32.totalorder %s20, 3
      %s212 = scalar_select %p211, %s20, 3
      %s213 = smul.addr %s210, 4
      %s214 = sadd.s32 %s212, %s213
      %s215 = smul.addr %s214, 4
      %s216 = scalar_lea.vmem %s0, %s215
      %p217 = pneg %p56
      %p218 = pneg %p53
      %p219 = scmp.lt.s32.totalorder %s19, 1
      %s220 = scalar_select %p219, %s19, 1
      %p221 = scmp.lt.s32.totalorder %s20, 3
      %s222 = scalar_select %p221, %s20, 3
      %p223 = scmp.lt.s32.totalorder %s21, 0
      %s224 = scalar_select %p223, %s21, 0
      %s225 = sadd.s32 %s224, %s222
      %s226 = smul.addr %s220, 4
      %s227 = sadd.s32 %s225, %s226
      %s228 = smul.addr %s227, 4
      %s229 = scalar_lea.vmem %s1, %s228
      %p230 = pneg %p86
      %p231 = pneg %p83
      %p232 = scmp.lt.s32.totalorder %s19, 1
      %s233 = scalar_select %p232, %s19, 1
      %p234 = scmp.lt.s32.totalorder %s20, 3
      %s235 = scalar_select %p234, %s20, 3
      %p236 = scmp.lt.s32.totalorder %s21, 0
      %s237 = scalar_select %p236, %s21, 0
      %s238 = sadd.s32 %s237, %s235
      %s239 = smul.addr %s233, 4
      %s240 = sadd.s32 %s238, %s239
      %s241 = smul.addr %s240, 4
      %s242 = scalar_lea.vmem %s2, %s241
      %p243 = pneg %p116
      %p244 = pneg %p113
      %p245 = pneg %p144
      %p246 = pneg %p141
      %p247 = scmp.lt.s32.totalorder %s19, 1
      %s248 = scalar_select %p247, %s19, 1
      %p249 = scmp.lt.s32.totalorder %s20, 3
      %s250 = scalar_select %p249, %s20, 3
      %s251 = smul.addr %s248, 4
      %s252 = sadd.s32 %s250, %s251
      %s253 = smul.addr %s252, 4
      %s254 = scalar_lea.vmem %s3, %s253
      %p255 = scmp.lt.s32.totalorder %s19, 1
      %s256 = scalar_select %p255, %s19, 1
      %p257 = scmp.lt.s32.totalorder %s20, 3
      %s258 = scalar_select %p257, %s20, 3
      %s259 = smul.addr %s256, 4
      %s260 = sadd.s32 %s258, %s259
      %s261 = smul.addr %s260, 4
      %s262 = scalar_lea.vmem %s0, %s261
      %p263 = scmp.lt.s32.totalorder %s19, 1
      %s264 = scalar_select %p263, %s19, 1
      %p265 = scmp.lt.s32.totalorder %s20, 3
      %s266 = scalar_select %p265, %s20, 3
      %p267 = scmp.lt.s32.totalorder %s21, 0
      %s268 = scalar_select %p267, %s21, 0
      %s269 = sadd.s32 %s268, %s266
      %s270 = smul.addr %s264, 4
      %s271 = sadd.s32 %s269, %s270
      %s272 = smul.addr %s271, 4
      %s273 = scalar_lea.vmem %s1, %s272
      %p274 = scmp.lt.s32.totalorder %s19, 1
      %s275 = scalar_select %p274, %s19, 1
      %p276 = scmp.lt.s32.totalorder %s20, 3
      %s277 = scalar_select %p276, %s20, 3
      %p278 = scmp.lt.s32.totalorder %s21, 0
      %s279 = scalar_select %p278, %s21, 0
      %s280 = sadd.s32 %s279, %s277
      %s281 = smul.addr %s275, 4
      %s282 = sadd.s32 %s280, %s281
      %s283 = smul.addr %s282, 4
      %s284 = scalar_lea.vmem %s2, %s283
      %p285 = scmp.lt.s32.totalorder %s19, 1
      %s286 = scalar_select %p285, %s19, 1
      %p287 = scmp.lt.s32.totalorder %s20, 3
      %s288 = scalar_select %p287, %s20, 3
      %s289 = smul.addr %s286, 4
      %s290 = sadd.s32 %s288, %s289
      %s291 = smul.addr %s290, 4
      %s292 = scalar_lea.vmem %s3, %s291
      %p294 = scmp.eq.s32.totalorder %s21, 0
      // Predicated region
      $region33: #{huobz_transformer_forward.8} parent=31 // pred_check
        %p295 = pneg %p294
      $region34: #{huobz_transformer_forward.8} parent=31 // pred_check_branch
        %297 = sbr.rel (%p295) target = $region36
      $region35: #{huobz_transformer_forward.8} parent=31 // pred_region
        %vm298 = vcmask 7168
        %299 = vst.msk [vmem:[#allocation2] sm:$0xff] %vm298, -inf
        %300 = vst.msk [vmem:[#allocation3] sm:$0xff] %vm298, 0.0
        %vm301 = vcmask 64512
        %302 = vst.msk [vmem:[#allocation4] sm:$0xff] %vm301, 0.0
      $region36: #{huobz_transformer_forward.8} parent=31 // pred_fallthru
        _
      %v303 = vld [vmem:[%s262] sm:$0xf]
      %v304 = vld [vmem:[%s273] sm:$0xf]
      %v305 = vld [vmem:[%s284] sm:$0xf]
      %vm306 = vcmask 64512
      %v308 = vsel %vm306, %v303, 0
      %v311 = vsel %vm306, %v304, 0
      %313 = vmatprep.subr.bf16.mxu0 0
      %314 = vmatpush1.bf16.xpose.msra.mxu0 0
      %315 = vmatprep.subr.bf16.mxu0 0
      %316 = vmatpush1.bf16.xpose.msra.mxu0 0
      %317 = vmatprep.subr.bf16.mxu0 0
      %318 = vmatpush1.bf16.xpose.msra.mxu0 0
      %319 = vmatprep.subr.bf16.mxu0 0
      %320 = vmatpush1.bf16.xpose.msra.mxu0 0
      %321 = vmatprep.subr.bf16.mxu0 0
      %322 = vmatpush1.bf16.xpose.msra.mxu0 0
      %323 = vmatprep.subr.bf16.mxu0 0
      %324 = vmatpush1.bf16.xpose.msra.mxu0 0
      %325 = vmatprep.subr.bf16.mxu0 0
      %326 = vmatpush1.bf16.xpose.msra.mxu0 0
      %327 = vmatprep.subr.bf16.mxu0 0
      %328 = vmatpush1.bf16.xpose.msra.mxu0 %v311
      %329 = vmatprep.subr.bf16.mxu0 0
      %330 = vmatpush2.bf16.xpose.msra.mxu0 0
      %331 = vmatprep.subr.bf16.mxu0 0
      %332 = vmatpush2.bf16.xpose.msra.mxu0 0
      %333 = vmatprep.subr.bf16.mxu0 0
      %334 = vmatpush2.bf16.xpose.msra.mxu0 0
      %335 = vmatprep.subr.bf16.mxu0 0
      %336 = vmatpush2.bf16.xpose.msra.mxu0 0
      %337 = vmatprep.subr.bf16.mxu0 0
      %338 = vmatpush2.bf16.xpose.msra.mxu0 0
      %339 = vmatprep.subr.bf16.mxu0 0
      %340 = vmatpush2.bf16.xpose.msra.mxu0 0
      %341 = vmatprep.subr.bf16.mxu0 0
      %342 = vmatpush2.bf16.xpose.msra.mxu0 0
      %343 = vmatprep.subr.bf16.mxu0 0
      %344 = vmatpush2.bf16.xpose.msra.mxu0 0
      %345 = vmatprep.mubr.bf16.mxu0 0
      %346 = vmatmul.mubr.bf16.gmra.mxu0 %v308
      %v347 = vpop.f32.mrf.mxu0
      %v348 = vadd.f32 0.0, %v347
      %v349 = vpop.f32.mrf.mxu0
      %v350 = vpop.f32.mrf.mxu0
      %v351 = vpop.f32.mrf.mxu0
      %352 = vdwg.mxu0
      %v353 = vld [vmem:[#allocation2] sm:$0xff]
      %v354 = vsel %vm306, %v348, -inf
      %355 = vmax.xlane.f32.xlu0 %v354
      %v356 = vpop.xlane.xlu0 %355
      %v357 = vmax.f32 %v353, %v356
      %v358 = vsub.f32 %v353, %v357
      %v359 = vmul.f32 %v358, 1.442695
      %v360 = vpow.pop %v359
      %362 = vset.pattern.permute.xlu0 0
      %363 = vperm.xlu0 %362, %v357
      %v364 = vpop.permute.xlu0 %363
      %v366 = vsub.f32 %v348, %v364
      %v367 = vmul.f32 %v366, 1.442695
      %v368 = vpow.pop %v367
      %v369 = vld [vmem:[#allocation3] sm:$0xff]
      %v370 = vmul.f32 %v360, %v369
      %v371 = vsel %vm306, %v368, 0.0
      %372 = vadd.xlane.f32.xlu0 %v371
      %v373 = vpop.xlane.xlu0 %372
      %v374 = vadd.f32 %v370, %v373
      %vm375 = vcmask 7168
      %376 = vst.msk [vmem:[#allocation3] sm:$0xff] %vm375, %v374
      %v377 = vld [vmem:[#allocation4] sm:$0xff]
      %379 = vset.pattern.permute.xlu0 0
      %380 = vperm.xlu0 %379, %v360
      %v381 = vpop.permute.xlu0 %380
      %v383 = vmul.f32 %v381, %v377
      %v384 = vpack.c.bf16 %v368, %v368
      %v386 = vsel %vm306, %v384, 0
      %vm388 = vcmask 1043456
      %v390 = vsel %vm388, %v305, 0
      %392 = vmatprep.subr.bf16.mxu0 0
      %393 = vmatpush1.bf16.msra.mxu0 0
      %394 = vmatprep.subr.bf16.mxu0 0
      %395 = vmatpush1.bf16.msra.mxu0 0
      %396 = vmatprep.subr.bf16.mxu0 0
      %397 = vmatpush1.bf16.msra.mxu0 0
      %398 = vmatprep.subr.bf16.mxu0 0
      %399 = vmatpush1.bf16.msra.mxu0 0
      %400 = vmatprep.subr.bf16.mxu0 0
      %401 = vmatpush1.bf16.msra.mxu0 0
      %402 = vmatprep.subr.bf16.mxu0 0
      %403 = vmatpush1.bf16.msra.mxu0 0
      %404 = vmatprep.subr.bf16.mxu0 0
      %405 = vmatpush1.bf16.msra.mxu0 0
      %406 = vmatprep.subr.bf16.mxu0 0
      %407 = vmatpush1.bf16.msra.mxu0 %v390
      %408 = vmatprep.subr.bf16.mxu0 0
      %409 = vmatpush2.bf16.msra.mxu0 0
      %410 = vmatprep.subr.bf16.mxu0 0
      %411 = vmatpush2.bf16.msra.mxu0 0
      %412 = vmatprep.subr.bf16.mxu0 0
      %413 = vmatpush2.bf16.msra.mxu0 0
      %414 = vmatprep.subr.bf16.mxu0 0
      %415 = vmatpush2.bf16.msra.mxu0 0
      %416 = vmatprep.subr.bf16.mxu0 0
      %417 = vmatpush2.bf16.msra.mxu0 0
      %418 = vmatprep.subr.bf16.mxu0 0
      %419 = vmatpush2.bf16.msra.mxu0 0
      %420 = vmatprep.subr.bf16.mxu0 0
      %421 = vmatpush2.bf16.msra.mxu0 0
      %422 = vmatprep.subr.bf16.mxu0 0
      %423 = vmatpush2.bf16.msra.mxu0 0
      %424 = vmatprep.mubr.bf16.mxu0 0
      %425 = vmatmul.mubr.bf16.gmra.mxu0 %v386
      %v426 = vpop.f32.mrf.mxu0
      %v427 = vadd.f32 0.0, %v426
      %v428 = vpop.f32.mrf.mxu0
      %v429 = vpop.f32.mrf.mxu0
      %v430 = vpop.f32.mrf.mxu0
      %431 = vdwg.mxu0
      %v432 = vadd.f32 %v383, %v427
      %433 = vst.msk [vmem:[#allocation4] sm:$0xff] %vm306, %v432
      %434 = vst.msk [vmem:[#allocation2] sm:$0xff] %vm375, %v357
      // Predicated region
      $region37: #{huobz_transformer_forward.8} parent=31 // pred_check
        %p435 = pneg %p294
      $region38: #{huobz_transformer_forward.8} parent=31 // pred_check_branch
        %437 = sbr.rel (%p435) target = $region40
      $region39: #{huobz_transformer_forward.8} parent=31 // pred_region
        %v438 = vld [vmem:[#allocation4] sm:$0xff]
        %v439 = vld [vmem:[#allocation3] sm:$0xff]
        %441 = vset.pattern.permute.xlu0 0
        %442 = vperm.xlu0 %441, %v439
        %v443 = vpop.permute.xlu0 %442
        %v445 = vrcp.pop %v443
        %v446 = vmul.f32 %v438, %v445
        %v447 = vpack.c.bf16 %v446, %v446
        %vm448 = vcmask 60416
        %449 = vst.msk [vmem:[%s292] sm:$0xf] %vm448, %v447
      $region40: #{huobz_transformer_forward.8} parent=31 // pred_fallthru
        _
      %p450 = scmp.lt.s32.totalorder %s19, 1
      %s451 = scalar_select %p450, %s19, 1
      %p452 = scmp.lt.s32.totalorder %s20, 3
      %s453 = scalar_select %p452, %s20, 3
      %s454 = smul.addr %s451, 4
      %s455 = sadd.s32 %s453, %s454
      %s456 = smul.addr %s455, 4
      %s457 = scalar_lea.vmem %s3, %s456
      // Predicated region
      $region41: #{huobz_transformer_forward.8} parent=31 // pred_check
        %p458 = pneg %p141
      $region42: #{huobz_transformer_forward.8} parent=31 // pred_check_branch
        %460 = sbr.rel (%p458) target = $region44
      $region43: #{huobz_transformer_forward.8} parent=31 // pred_region
        _
      $region44: #{huobz_transformer_forward.8} parent=31 // pred_fallthru
        _
    $region32: #{huobz_transformer_forward.8} parent=5 // pred_fallthru
      _
    %p461 = scmp.le.s32.totalorder 2, %s9
    // Predicated region
    $region45: #{huobz_transformer_forward.8} parent=5 // pred_check
      %p462 = pneg %p461
    $region46: #{huobz_transformer_forward.8} parent=5 // pred_check_branch
      %464 = sbr.rel (%p462) target = $region48
    $region47: #{huobz_transformer_forward.8} parent=5 // pred_region
      %s465 = ssub.s32 %s9, 2
      // Predicated region
      $region49: #{huobz_transformer_forward.8} parent=47 // pred_check
        %p466 = pneg %p147
      $region50: #{huobz_transformer_forward.8} parent=47 // pred_check_branch
        %468 = sbr.rel (%p466) target = $region52
      $region51: #{huobz_transformer_forward.8} parent=47 // pred_region
        %p469 = scmp.lt.s32.totalorder %s22, 1
        %s470 = scalar_select %p469, %s22, 1
        %p471 = scmp.lt.s32.totalorder %s23, 3
        %s472 = scalar_select %p471, %s23, 3
        %s473 = smul.addr %s470, 4
        %s474 = sadd.s32 %s472, %s473
        %s475 = smul.addr %s474, 4
        %s476 = scalar_lea.vmem %s3, %s475
      $region52: #{huobz_transformer_forward.8} parent=47 // pred_fallthru
        _
    $region48: #{huobz_transformer_forward.8} parent=5 // pred_fallthru
      _
  $region6: #{huobz_transformer_forward.8} parent=0 // loop_footer
    %s13 = sadd.s32 1, %s9
  $region7: #{huobz_transformer_forward.8} parent=0 // loop_footer_branch
    %8 = sbr.rel target = $region3
  $region8: #{huobz_transformer_forward.8} parent=0 // loop_exit
    _

// kernel: huobz_transformer_forward.13
$region0: #{huobz_transformer_forward.13}
  #allocation0 [shape = 'u32[]', space=smem, size = 0x4, offset = 0x4, fixed_abs, tag = 'smem constant byte address 0x4 - core index']
  #allocation1 [shape = 'u32[144,128]{1,0:T(1,128)}', space=vmem, size = 0x12000, scoped, tag = 'internal scratch']
  %s0 = inlined_call_operand.vmem [shape: bf16[16,32], index: 0, kind: input, shape index: {}]
  %s1 = inlined_call_operand.vmem [shape: bf16[32,128], index: 1, kind: input, shape index: {}]
  %s2 = inlined_call_operand.vmem [shape: f32[1,128], index: 2, kind: input, shape index: {}]
  %s3 = inlined_call_operand.vmem [shape: f32[16,128], index: 3, kind: output, shape index: {}]
  %s4 = sld [smem:[#allocation0]]
  $region22: #{huobz_transformer_forward.13} parent=0
    _
  %s6 = ssub.s32 1, %s4
  %s7 = scalar_select 0, %s6, %s4
  // Predicated region
  $region2: #{huobz_transformer_forward.13} parent=0 // pred_check
    _
  $region3: #{huobz_transformer_forward.13} parent=0 // pred_check_branch
    %9 = sbr.rel (0) target = $region5
  $region4: #{huobz_transformer_forward.13} parent=0 // pred_region
    _
  $region5: #{huobz_transformer_forward.13} parent=0 // pred_fallthru
    _
  // Predicated region
  $region6: #{huobz_transformer_forward.13} parent=0 // pred_check
    _
  $region7: #{huobz_transformer_forward.13} parent=0 // pred_check_branch
    %11 = sbr.rel (0) target = $region9
  $region8: #{huobz_transformer_forward.13} parent=0 // pred_region
    _
  $region9: #{huobz_transformer_forward.13} parent=0 // pred_fallthru
    _
  // Predicated region
  $region10: #{huobz_transformer_forward.13} parent=0 // pred_check
    _
  $region11: #{huobz_transformer_forward.13} parent=0 // pred_check_branch
    %13 = sbr.rel (0) target = $region13
  $region12: #{huobz_transformer_forward.13} parent=0 // pred_region
    _
  $region13: #{huobz_transformer_forward.13} parent=0 // pred_fallthru
    _
  %v15 = vld [vmem:[%s0] sm:$0xf]
  %v16 = vld [vmem:[%s0 + $0x4] sm:$0xf]
  %v17 = vld [vmem:[%s1] sm:$0xf]
  %v18 = vld [vmem:[%s1 + $0x4] sm:$0xf]
  %v19 = vld [vmem:[%s1 + $0x8] sm:$0xf]
  %v20 = vld [vmem:[%s1 + $0xc] sm:$0xf]
  %v21 = vld [vmem:[%s2] sm:$0x1]
  %v23 = vlaneseq
  %v24 = vshrl.u32 %v23, 7
  %v25 = vsub.s32 0, %v24
  %v26 = vrot.slane %v21, %v25
  %v30 = vunpack.c.l.b16 %v15
  %v31 = vunpack.c.l.b16 %v16
  %v32 = vpack.c.b16 %v31, %v30
  %v37 = vunpack.c.l.b16 %v17
  %v38 = vunpack.c.l.b16 %v18
  %v39 = vunpack.c.l.b16 %v19
  %v40 = vunpack.c.l.b16 %v20
  %v41 = vpack.c.b16 %v38, %v37
  %v42 = vpack.c.b16 %v40, %v39
  %vm45 = vcmask 261120
  %v47 = vsel %vm45, %v32, 0
  %49 = vmatprep.subr.bf16.mxu0 0
  %50 = vmatpush1.bf16.msra.mxu0 0
  %51 = vmatprep.subr.bf16.mxu0 0
  %52 = vmatpush1.bf16.msra.mxu0 0
  %53 = vmatprep.subr.bf16.mxu0 0
  %54 = vmatpush1.bf16.msra.mxu0 0
  %55 = vmatprep.subr.bf16.mxu0 0
  %56 = vmatpush1.bf16.msra.mxu0 0
  %57 = vmatprep.subr.bf16.mxu0 0
  %58 = vmatpush1.bf16.msra.mxu0 0
  %59 = vmatprep.subr.bf16.mxu0 0
  %60 = vmatpush1.bf16.msra.mxu0 0
  %61 = vmatprep.subr.bf16.mxu0 0
  %62 = vmatpush1.bf16.msra.mxu0 %v42
  %63 = vmatprep.subr.bf16.mxu0 0
  %64 = vmatpush1.bf16.msra.mxu0 %v41
  %65 = vmatprep.subr.bf16.mxu0 0
  %66 = vmatpush2.bf16.msra.mxu0 0
  %67 = vmatprep.subr.bf16.mxu0 0
  %68 = vmatpush2.bf16.msra.mxu0 0
  %69 = vmatprep.subr.bf16.mxu0 0
  %70 = vmatpush2.bf16.msra.mxu0 0
  %71 = vmatprep.subr.bf16.mxu0 0
  %72 = vmatpush2.bf16.msra.mxu0 0
  %73 = vmatprep.subr.bf16.mxu0 0
  %74 = vmatpush2.bf16.msra.mxu0 0
  %75 = vmatprep.subr.bf16.mxu0 0
  %76 = vmatpush2.bf16.msra.mxu0 0
  %77 = vmatprep.subr.bf16.mxu0 0
  %78 = vmatpush2.bf16.msra.mxu0 0
  %79 = vmatprep.subr.bf16.mxu0 0
  %80 = vmatpush2.bf16.msra.mxu0 0
  %81 = vmatprep.mubr.bf16.mxu0 0
  %82 = vmatmul.mubr.bf16.gmra.mxu0 %v47
  %v83 = vpop.f32.mrf.mxu0
  %v84 = vadd.f32 %v26, %v83
  %v85 = vpop.f32.mrf.mxu0
  %v86 = vpop.f32.mrf.mxu0
  %v87 = vadd.f32 %v26, %v86
  %v88 = vpop.f32.mrf.mxu0
  %89 = vdwg.mxu0
  %90 = vst [vmem:[%s3] sm:$0xff] %v84
  %91 = vst [vmem:[%s3 + $0x8] sm:$0xff] %v87
  // Predicated region
  $region14: #{huobz_transformer_forward.13} parent=0 // pred_check
    _
  $region15: #{huobz_transformer_forward.13} parent=0 // pred_check_branch
    %93 = sbr.rel (0) target = $region17
  $region16: #{huobz_transformer_forward.13} parent=0 // pred_region
    _
  $region17: #{huobz_transformer_forward.13} parent=0 // pred_fallthru
    _
  // Predicated region
  $region18: #{huobz_transformer_forward.13} parent=0 // pred_check
    _
  $region19: #{huobz_transformer_forward.13} parent=0 // pred_check_branch
    %95 = sbr.rel (0) target = $region21
  $region20: #{huobz_transformer_forward.13} parent=0 // pred_region
    _
  $region21: #{huobz_transformer_forward.13} parent=0 // pred_fallthru
    _

// kernel: huobz_transformer_forward.9
$region0: #{huobz_transformer_forward.9}
  #allocation0 [shape = 'u32[]', space=smem, size = 0x4, offset = 0x4, fixed_abs, tag = 'smem constant byte address 0x4 - core index']
  #allocation1 [shape = 'u32[144,128]{1,0:T(1,128)}', space=vmem, size = 0x12000, scoped, tag = 'internal scratch']
  %s0 = inlined_call_operand.vmem [shape: bf16[16,32], index: 0, kind: input, shape index: {}]
  %s1 = inlined_call_operand.vmem [shape: f32[16,32], index: 1, kind: input, shape index: {}]
  %s2 = inlined_call_operand.vmem [shape: bf16[32,32], index: 2, kind: input, shape index: {}]
  %s3 = inlined_call_operand.vmem [shape: f32[1,32], index: 3, kind: input, shape index: {}]
  %s4 = inlined_call_operand.vmem [shape: f32[1,32], index: 4, kind: input, shape index: {}]
  %s5 = inlined_call_operand.vmem [shape: f32[1,32], index: 5, kind: input, shape index: {}]
  %s6 = inlined_call_operand.vmem [shape: bf16[32,128], index: 6, kind: input, shape index: {}]
  %s7 = inlined_call_operand.vmem [shape: f32[1,128], index: 7, kind: input, shape index: {}]
  %s8 = inlined_call_operand.vmem [shape: bf16[128,32], index: 8, kind: input, shape index: {}]
  %s9 = inlined_call_operand.vmem [shape: f32[1,32], index: 9, kind: input, shape index: {}]
  %s10 = inlined_call_operand.vmem [shape: f32[1,32], index: 10, kind: input, shape index: {}]
  %s11 = inlined_call_operand.vmem [shape: f32[1,32], index: 11, kind: input, shape index: {}]
  %s12 = inlined_call_operand.vmem [shape: f32[16,32], index: 12, kind: output, shape index: {}]
  %s13 = sld [smem:[#allocation0]]
  $region58: #{huobz_transformer_forward.9} parent=0
    _
  %s15 = ssub.s32 1, %s13
  %s16 = scalar_select 0, %s15, %s13
  // Predicated region
  $region2: #{huobz_transformer_forward.9} parent=0 // pred_check
    _
  $region3: #{huobz_transformer_forward.9} parent=0 // pred_check_branch
    %18 = sbr.rel (0) target = $region5
  $region4: #{huobz_transformer_forward.9} parent=0 // pred_region
    _
  $region5: #{huobz_transformer_forward.9} parent=0 // pred_fallthru
    _
  // Predicated region
  $region6: #{huobz_transformer_forward.9} parent=0 // pred_check
    _
  $region7: #{huobz_transformer_forward.9} parent=0 // pred_check_branch
    %20 = sbr.rel (0) target = $region9
  $region8: #{huobz_transformer_forward.9} parent=0 // pred_region
    _
  $region9: #{huobz_transformer_forward.9} parent=0 // pred_fallthru
    _
  // Predicated region
  $region10: #{huobz_transformer_forward.9} parent=0 // pred_check
    _
  $region11: #{huobz_transformer_forward.9} parent=0 // pred_check_branch
    %22 = sbr.rel (0) target = $region13
  $region12: #{huobz_transformer_forward.9} parent=0 // pred_region
    _
  $region13: #{huobz_transformer_forward.9} parent=0 // pred_fallthru
    _
  // Predicated region
  $region14: #{huobz_transformer_forward.9} parent=0 // pred_check
    _
  $region15: #{huobz_transformer_forward.9} parent=0 // pred_check_branch
    %24 = sbr.rel (0) target = $region17
  $region16: #{huobz_transformer_forward.9} parent=0 // pred_region
    _
  $region17: #{huobz_transformer_forward.9} parent=0 // pred_fallthru
    _
  // Predicated region
  $region18: #{huobz_transformer_forward.9} parent=0 // pred_check
    _
  $region19: #{huobz_transformer_forward.9} parent=0 // pred_check_branch
    %26 = sbr.rel (0) target = $region21
  $region20: #{huobz_transformer_forward.9} parent=0 // pred_region
    _
  $region21: #{huobz_transformer_forward.9} parent=0 // pred_fallthru
    _
  // Predicated region
  $region22: #{huobz_transformer_forward.9} parent=0 // pred_check
    _
  $region23: #{huobz_transformer_forward.9} parent=0 // pred_check_branch
    %28 = sbr.rel (0) target = $region25
  $region24: #{huobz_transformer_forward.9} parent=0 // pred_region
    _
  $region25: #{huobz_transformer_forward.9} parent=0 // pred_fallthru
    _
  // Predicated region
  $region26: #{huobz_transformer_forward.9} parent=0 // pred_check
    _
  $region27: #{huobz_transformer_forward.9} parent=0 // pred_check_branch
    %30 = sbr.rel (0) target = $region29
  $region28: #{huobz_transformer_forward.9} parent=0 // pred_region
    _
  $region29: #{huobz_transformer_forward.9} parent=0 // pred_fallthru
    _
  // Predicated region
  $region30: #{huobz_transformer_forward.9} parent=0 // pred_check
    _
  $region31: #{huobz_transformer_forward.9} parent=0 // pred_check_branch
    %32 = sbr.rel (0) target = $region33
  $region32: #{huobz_transformer_forward.9} parent=0 // pred_region
    _
  $region33: #{huobz_transformer_forward.9} parent=0 // pred_fallthru
    _
  // Predicated region
  $region34: #{huobz_transformer_forward.9} parent=0 // pred_check
    _
  $region35: #{huobz_transformer_forward.9} parent=0 // pred_check_branch
    %34 = sbr.rel (0) target = $region37
  $region36: #{huobz_transformer_forward.9} parent=0 // pred_region
    _
  $region37: #{huobz_transformer_forward.9} parent=0 // pred_fallthru
    _
  // Predicated region
  $region38: #{huobz_transformer_forward.9} parent=0 // pred_check
    _
  $region39: #{huobz_transformer_forward.9} parent=0 // pred_check_branch
    %36 = sbr.rel (0) target = $region41
  $region40: #{huobz_transformer_forward.9} parent=0 // pred_region
    _
  $region41: #{huobz_transformer_forward.9} parent=0 // pred_fallthru
    _
  // Predicated region
  $region42: #{huobz_transformer_forward.9} parent=0 // pred_check
    _
  $region43: #{huobz_transformer_forward.9} parent=0 // pred_check_branch
    %38 = sbr.rel (0) target = $region45
  $region44: #{huobz_transformer_forward.9} parent=0 // pred_region
    _
  $region45: #{huobz_transformer_forward.9} parent=0 // pred_fallthru
    _
  // Predicated region
  $region46: #{huobz_transformer_forward.9} parent=0 // pred_check
    _
  $region47: #{huobz_transformer_forward.9} parent=0 // pred_check_branch
    %40 = sbr.rel (0) target = $region49
  $region48: #{huobz_transformer_forward.9} parent=0 // pred_region
    _
  $region49: #{huobz_transformer_forward.9} parent=0 // pred_fallthru
    _
  %v42 = vld [vmem:[%s1] sm:$0xff]
  %v43 = vld [vmem:[%s1 + $0x8] sm:$0xff]
  %v44 = vld [vmem:[%s0] sm:$0xf]
  %v45 = vld [vmem:[%s0 + $0x4] sm:$0xf]
  %v46 = vld [vmem:[%s2] sm:$0xf]
  %v47 = vld [vmem:[%s2 + $0x4] sm:$0xf]
  %v48 = vld [vmem:[%s2 + $0x8] sm:$0xf]
  %v49 = vld [vmem:[%s2 + $0xc] sm:$0xf]
  %v50 = vld [vmem:[%s3] sm:$0x1]
  %v52 = vlaneseq
  %v53 = vshrl.u32 %v52, 7
  %v54 = vsub.s32 0, %v53
  %v55 = vrot.slane %v50, %v54
  %v59 = vunpack.c.l.b16 %v44
  %v60 = vunpack.c.l.b16 %v45
  %v61 = vpack.c.b16 %v60, %v59
  %v66 = vunpack.c.l.b16 %v46
  %v67 = vunpack.c.l.b16 %v47
  %v68 = vunpack.c.l.b16 %v48
  %v69 = vunpack.c.l.b16 %v49
  %v70 = vpack.c.b16 %v67, %v66
  %v71 = vpack.c.b16 %v69, %v68
  %vm74 = vcmask 261120
  %v76 = vsel %vm74, %v61, 0
  %78 = vmatprep.subr.bf16.mxu0 0
  %79 = vmatpush1.bf16.msra.mxu0 0
  %80 = vmatprep.subr.bf16.mxu0 0
  %81 = vmatpush1.bf16.msra.mxu0 0
  %82 = vmatprep.subr.bf16.mxu0 0
  %83 = vmatpush1.bf16.msra.mxu0 0
  %84 = vmatprep.subr.bf16.mxu0 0
  %85 = vmatpush1.bf16.msra.mxu0 0
  %86 = vmatprep.subr.bf16.mxu0 0
  %87 = vmatpush1.bf16.msra.mxu0 0
  %88 = vmatprep.subr.bf16.mxu0 0
  %89 = vmatpush1.bf16.msra.mxu0 0
  %90 = vmatprep.subr.bf16.mxu0 0
  %91 = vmatpush1.bf16.msra.mxu0 %v71
  %92 = vmatprep.subr.bf16.mxu0 0
  %93 = vmatpush1.bf16.msra.mxu0 %v70
  %94 = vmatprep.subr.bf16.mxu0 0
  %95 = vmatpush2.bf16.msra.mxu0 0
  %96 = vmatprep.subr.bf16.mxu0 0
  %97 = vmatpush2.bf16.msra.mxu0 0
  %98 = vmatprep.subr.bf16.mxu0 0
  %99 = vmatpush2.bf16.msra.mxu0 0
  %100 = vmatprep.subr.bf16.mxu0 0
  %101 = vmatpush2.bf16.msra.mxu0 0
  %102 = vmatprep.subr.bf16.mxu0 0
  %103 = vmatpush2.bf16.msra.mxu0 0
  %104 = vmatprep.subr.bf16.mxu0 0
  %105 = vmatpush2.bf16.msra.mxu0 0
  %106 = vmatprep.subr.bf16.mxu0 0
  %107 = vmatpush2.bf16.msra.mxu0 0
  %108 = vmatprep.subr.bf16.mxu0 0
  %109 = vmatpush2.bf16.msra.mxu0 0
  %110 = vmatprep.mubr.bf16.mxu0 0
  %111 = vmatmul.mubr.bf16.gmra.mxu0 %v76
  %v112 = vpop.f32.mrf.mxu0
  %v113 = vadd.f32 %v55, %v112
  %v114 = vpop.f32.mrf.mxu0
  %v115 = vpop.f32.mrf.mxu0
  %v116 = vadd.f32 %v55, %v115
  %v117 = vpop.f32.mrf.mxu0
  %118 = vdwg.mxu0
  %v119 = vadd.f32 %v42, %v113
  %v120 = vadd.f32 %v43, %v116
  %v121 = vld [vmem:[%s4] sm:$0x1]
  %v122 = vld [vmem:[%s5] sm:$0x1]
  %v123 = vsel %vm74, %v119, 0.0
  %124 = vadd.xlane.f32.xlu0 %v123
  %v125 = vpop.xlane.xlu0 %124
  %v126 = vsel %vm74, %v120, 0.0
  %127 = vadd.xlane.f32.xlu0 %v126
  %v128 = vpop.xlane.xlu0 %127
  %v129 = vrcp.pop 32.0
  %v130 = vmul.f32 %v125, %v129
  %v131 = vmul.f32 %v128, %v129
  %v132 = vsub.f32 %v119, %v130
  %v133 = vsub.f32 %v120, %v131
  %v134 = vmul.f32 %v132, %v132
  %v135 = vmul.f32 %v133, %v133
  %v136 = vsel %vm74, %v134, 0.0
  %137 = vadd.xlane.f32.xlu0 %v136
  %v138 = vpop.xlane.xlu0 %137
  %v139 = vsel %vm74, %v135, 0.0
  %140 = vadd.xlane.f32.xlu0 %v139
  %v141 = vpop.xlane.xlu0 %140
  %v142 = vmul.f32 %v138, %v129
  %v143 = vmul.f32 %v141, %v129
  %v144 = vadd.f32 %v142, 1e-05
  %v145 = vadd.f32 %v143, 1e-05
  %v146 = vrsqrt.pop %v144
  %v147 = vrsqrt.pop %v145
  %v148 = vmul.f32 %v132, %v146
  %v149 = vmul.f32 %v133, %v147
  %v151 = vlaneseq
  %v152 = vshrl.u32 %v151, 7
  %v153 = vsub.s32 0, %v152
  %v154 = vrot.slane %v121, %v153
  %v156 = vmul.f32 %v148, %v154
  %v157 = vmul.f32 %v149, %v154
  %v159 = vlaneseq
  %v160 = vshrl.u32 %v159, 7
  %v161 = vsub.s32 0, %v160
  %v162 = vrot.slane %v122, %v161
  %v164 = vadd.f32 %v156, %v162
  %v165 = vadd.f32 %v157, %v162
  %v166 = vpack.c.bf16 %v165, %v164
  %v167 = vld [vmem:[%s6] sm:$0xf]
  %v168 = vld [vmem:[%s6 + $0x4] sm:$0xf]
  %v169 = vld [vmem:[%s6 + $0x8] sm:$0xf]
  %v170 = vld [vmem:[%s6 + $0xc] sm:$0xf]
  %v171 = vld [vmem:[%s7] sm:$0x1]
  %v173 = vlaneseq
  %v174 = vshrl.u32 %v173, 7
  %v175 = vsub.s32 0, %v174
  %v176 = vrot.slane %v171, %v175
  %v182 = vunpack.c.l.b16 %v167
  %v183 = vunpack.c.l.b16 %v168
  %v184 = vunpack.c.l.b16 %v169
  %v185 = vunpack.c.l.b16 %v170
  %v186 = vpack.c.b16 %v183, %v182
  %v187 = vpack.c.b16 %v185, %v184
  %v191 = vsel %vm74, %v166, 0
  %193 = vmatprep.subr.bf16.mxu0 0
  %194 = vmatpush1.bf16.msra.mxu0 0
  %195 = vmatprep.subr.bf16.mxu0 0
  %196 = vmatpush1.bf16.msra.mxu0 0
  %197 = vmatprep.subr.bf16.mxu0 0
  %198 = vmatpush1.bf16.msra.mxu0 0
  %199 = vmatprep.subr.bf16.mxu0 0
  %200 = vmatpush1.bf16.msra.mxu0 0
  %201 = vmatprep.subr.bf16.mxu0 0
  %202 = vmatpush1.bf16.msra.mxu0 0
  %203 = vmatprep.subr.bf16.mxu0 0
  %204 = vmatpush1.bf16.msra.mxu0 0
  %205 = vmatprep.subr.bf16.mxu0 0
  %206 = vmatpush1.bf16.msra.mxu0 %v187
  %207 = vmatprep.subr.bf16.mxu0 0
  %208 = vmatpush1.bf16.msra.mxu0 %v186
  %209 = vmatprep.subr.bf16.mxu0 0
  %210 = vmatpush2.bf16.msra.mxu0 0
  %211 = vmatprep.subr.bf16.mxu0 0
  %212 = vmatpush2.bf16.msra.mxu0 0
  %213 = vmatprep.subr.bf16.mxu0 0
  %214 = vmatpush2.bf16.msra.mxu0 0
  %215 = vmatprep.subr.bf16.mxu0 0
  %216 = vmatpush2.bf16.msra.mxu0 0
  %217 = vmatprep.subr.bf16.mxu0 0
  %218 = vmatpush2.bf16.msra.mxu0 0
  %219 = vmatprep.subr.bf16.mxu0 0
  %220 = vmatpush2.bf16.msra.mxu0 0
  %221 = vmatprep.subr.bf16.mxu0 0
  %222 = vmatpush2.bf16.msra.mxu0 0
  %223 = vmatprep.subr.bf16.mxu0 0
  %224 = vmatpush2.bf16.msra.mxu0 0
  %225 = vmatprep.mubr.bf16.mxu0 0
  %226 = vmatmul.mubr.bf16.gmra.mxu0 %v191
  %v227 = vpop.f32.mrf.mxu0
  %v228 = vadd.f32 %v176, %v227
  %v229 = vpop.f32.mrf.mxu0
  %v230 = vpop.f32.mrf.mxu0
  %v231 = vadd.f32 %v176, %v230
  %v232 = vpop.f32.mrf.mxu0
  %233 = vdwg.mxu0
  %v234 = vmax.f32 %v228, 0.0
  %v235 = vmax.f32 %v231, 0.0
  %v236 = vpack.c.bf16 %v235, %v234
  %v237 = vld [vmem:[%s8] sm:$0xf]
  %v238 = vld [vmem:[%s8 + $0x4] sm:$0xf]
  %v239 = vld [vmem:[%s8 + $0x8] sm:$0xf]
  %v240 = vld [vmem:[%s8 + $0xc] sm:$0xf]
  %v241 = vld [vmem:[%s8 + $0x10] sm:$0xf]
  %v242 = vld [vmem:[%s8 + $0x14] sm:$0xf]
  %v243 = vld [vmem:[%s8 + $0x18] sm:$0xf]
  %v244 = vld [vmem:[%s8 + $0x1c] sm:$0xf]
  %v245 = vld [vmem:[%s8 + $0x20] sm:$0xf]
  %v246 = vld [vmem:[%s8 + $0x24] sm:$0xf]
  %v247 = vld [vmem:[%s8 + $0x28] sm:$0xf]
  %v248 = vld [vmem:[%s8 + $0x2c] sm:$0xf]
  %v249 = vld [vmem:[%s8 + $0x30] sm:$0xf]
  %v250 = vld [vmem:[%s8 + $0x34] sm:$0xf]
  %v251 = vld [vmem:[%s8 + $0x38] sm:$0xf]
  %v252 = vld [vmem:[%s8 + $0x3c] sm:$0xf]
  %v253 = vld [vmem:[%s9] sm:$0x1]
  %v255 = vlaneseq
  %v256 = vshrl.u32 %v255, 7
  %v257 = vsub.s32 0, %v256
  %v258 = vrot.slane %v253, %v257
  %v276 = vunpack.c.l.b16 %v237
  %v277 = vunpack.c.l.b16 %v238
  %v278 = vunpack.c.l.b16 %v239
  %v279 = vunpack.c.l.b16 %v240
  %v280 = vunpack.c.l.b16 %v241
  %v281 = vunpack.c.l.b16 %v242
  %v282 = vunpack.c.l.b16 %v243
  %v283 = vunpack.c.l.b16 %v244
  %v284 = vunpack.c.l.b16 %v245
  %v285 = vunpack.c.l.b16 %v246
  %v286 = vunpack.c.l.b16 %v247
  %v287 = vunpack.c.l.b16 %v248
  %v288 = vunpack.c.l.b16 %v249
  %v289 = vunpack.c.l.b16 %v250
  %v290 = vunpack.c.l.b16 %v251
  %v291 = vunpack.c.l.b16 %v252
  %v292 = vpack.c.b16 %v277, %v276
  %v293 = vpack.c.b16 %v279, %v278
  %v294 = vpack.c.b16 %v281, %v280
  %v295 = vpack.c.b16 %v283, %v282
  %v296 = vpack.c.b16 %v285, %v284
  %v297 = vpack.c.b16 %v287, %v286
  %v298 = vpack.c.b16 %v289, %v288
  %v299 = vpack.c.b16 %v291, %v290
  %308 = vmatprep.subr.bf16.mxu0 0
  %309 = vmatpush1.bf16.msra.mxu0 %v299
  %310 = vmatprep.subr.bf16.mxu0 0
  %311 = vmatpush1.bf16.msra.mxu0 %v298
  %312 = vmatprep.subr.bf16.mxu0 0
  %313 = vmatpush1.bf16.msra.mxu0 %v297
  %314 = vmatprep.subr.bf16.mxu0 0
  %315 = vmatpush1.bf16.msra.mxu0 %v296
  %316 = vmatprep.subr.bf16.mxu0 0
  %317 = vmatpush1.bf16.msra.mxu0 %v295
  %318 = vmatprep.subr.bf16.mxu0 0
  %319 = vmatpush1.bf16.msra.mxu0 %v294
  %320 = vmatprep.subr.bf16.mxu0 0
  %321 = vmatpush1.bf16.msra.mxu0 %v293
  %322 = vmatprep.subr.bf16.mxu0 0
  %323 = vmatpush1.bf16.msra.mxu0 %v292
  %324 = vmatprep.subr.bf16.mxu0 0
  %325 = vmatpush2.bf16.msra.mxu0 0
  %326 = vmatprep.subr.bf16.mxu0 0
  %327 = vmatpush2.bf16.msra.mxu0 0
  %328 = vmatprep.subr.bf16.mxu0 0
  %329 = vmatpush2.bf16.msra.mxu0 0
  %330 = vmatprep.subr.bf16.mxu0 0
  %331 = vmatpush2.bf16.msra.mxu0 0
  %332 = vmatprep.subr.bf16.mxu0 0
  %333 = vmatpush2.bf16.msra.mxu0 0
  %334 = vmatprep.subr.bf16.mxu0 0
  %335 = vmatpush2.bf16.msra.mxu0 0
  %336 = vmatprep.subr.bf16.mxu0 0
  %337 = vmatpush2.bf16.msra.mxu0 0
  %338 = vmatprep.subr.bf16.mxu0 0
  %339 = vmatpush2.bf16.msra.mxu0 0
  %340 = vmatprep.mubr.bf16.mxu0 0
  %341 = vmatmul.mubr.bf16.gmra.mxu0 %v236
  %v342 = vpop.f32.mrf.mxu0
  %v343 = vadd.f32 %v258, %v342
  %v344 = vpop.f32.mrf.mxu0
  %v345 = vpop.f32.mrf.mxu0
  %v346 = vadd.f32 %v258, %v345
  %v347 = vpop.f32.mrf.mxu0
  %348 = vdwg.mxu0
  %v349 = vadd.f32 %v164, %v343
  %v350 = vadd.f32 %v165, %v346
  %v351 = vld [vmem:[%s10] sm:$0x1]
  %v352 = vld [vmem:[%s11] sm:$0x1]
  %v353 = vsel %vm74, %v349, 0.0
  %354 = vadd.xlane.f32.xlu0 %v353
  %v355 = vpop.xlane.xlu0 %354
  %v356 = vsel %vm74, %v350, 0.0
  %357 = vadd.xlane.f32.xlu0 %v356
  %v358 = vpop.xlane.xlu0 %357
  %v359 = vmul.f32 %v355, %v129
  %v360 = vmul.f32 %v358, %v129
  %v361 = vsub.f32 %v349, %v359
  %v362 = vsub.f32 %v350, %v360
  %v363 = vmul.f32 %v361, %v361
  %v364 = vmul.f32 %v362, %v362
  %v365 = vsel %vm74, %v363, 0.0
  %366 = vadd.xlane.f32.xlu0 %v365
  %v367 = vpop.xlane.xlu0 %366
  %v368 = vsel %vm74, %v364, 0.0
  %369 = vadd.xlane.f32.xlu0 %v368
  %v370 = vpop.xlane.xlu0 %369
  %v371 = vmul.f32 %v367, %v129
  %v372 = vmul.f32 %v370, %v129
  %v373 = vadd.f32 %v371, 1e-05
  %v374 = vadd.f32 %v372, 1e-05
  %v375 = vrsqrt.pop %v373
  %v376 = vrsqrt.pop %v374
  %v377 = vmul.f32 %v361, %v375
  %v378 = vmul.f32 %v362, %v376
  %v380 = vlaneseq
  %v381 = vshrl.u32 %v380, 7
  %v382 = vsub.s32 0, %v381
  %v383 = vrot.slane %v351, %v382
  %v385 = vmul.f32 %v377, %v383
  %v386 = vmul.f32 %v378, %v383
  %v388 = vlaneseq
  %v389 = vshrl.u32 %v388, 7
  %v390 = vsub.s32 0, %v389
  %v391 = vrot.slane %v352, %v390
  %v393 = vadd.f32 %v385, %v391
  %v394 = vadd.f32 %v386, %v391
  %395 = vst.msk [vmem:[%s12] sm:$0xff] %vm74, %v393
  %396 = vst.msk [vmem:[%s12 + $0x8] sm:$0xff] %vm74, %v394
  // Predicated region
  $region50: #{huobz_transformer_forward.9} parent=0 // pred_check
    _
  $region51: #{huobz_transformer_forward.9} parent=0 // pred_check_branch
    %398 = sbr.rel (0) target = $region53
  $region52: #{huobz_transformer_forward.9} parent=0 // pred_region
    _
  $region53: #{huobz_transformer_forward.9} parent=0 // pred_fallthru
    _
  // Predicated region
  $region54: #{huobz_transformer_forward.9} parent=0 // pred_check
    _
  $region55: #{huobz_transformer_forward.9} parent=0 // pred_check_branch
    %400 = sbr.rel (0) target = $region57
  $region56: #{huobz_transformer_forward.9} parent=0 // pred_region
    _
  $region57: #{huobz_transformer_forward.9} parent=0 // pred_fallthru
    _

</llo_original>
